<compile_context>
chip_gen: v6e
topology: v6e:2x2x1
jax: 0.10.0
libtpu: 0.0.40
codegen_flags: <defaults>
</compile_context>

<pallas_src>
import jax
import jax.numpy as jnp
from jax.experimental import pallas as pl
from jax.experimental.pallas import tpu as pltpu

H_DIM = 400
IN_DIM = 2
OUT_DIM = 2

H_PAD = 512     # 400 rounded up to a multiple of 128
OUT_PAD = 128   # lane-dense output width


def _round_up(x, m):
    return ((x + m - 1) // m) * m


def _mlp_kernel(z_ref,
                w1_ref, b1_ref,
                w2_ref, b2_ref,
                w3_ref, b3_ref,
                w4_ref, b4_ref,
                o_ref):
    z = z_ref[...].astype(jnp.float32)

    # Layer 1: K=2 contraction as a VPU rank-2 broadcast update (skips the MXU).
    h = (z[:, 0:1] * w1_ref[0:1, :].astype(jnp.float32)
         + z[:, 1:2] * w1_ref[1:2, :].astype(jnp.float32)
         + b1_ref[...].astype(jnp.float32))
    h = jnp.maximum(h, 0.0)

    # Layer 2: (bt, 512) @ (512, 512) -> ReLU  (f32 accumulate on the MXU)
    h = jnp.dot(h.astype(w2_ref.dtype), w2_ref[...],
                preferred_element_type=jnp.float32)
    h = jnp.maximum(h + b2_ref[...].astype(jnp.float32), 0.0)

    # Layer 3: (bt, 512) @ (512, 512) -> ReLU
    h = jnp.dot(h.astype(w3_ref.dtype), w3_ref[...],
                preferred_element_type=jnp.float32)
    h = jnp.maximum(h + b3_ref[...].astype(jnp.float32), 0.0)

    # Layer 4: (bt, 512) @ (512, 128)  — lane-dense padded output, no activation
    out = jnp.dot(h.astype(w4_ref.dtype), w4_ref[...],
                  preferred_element_type=jnp.float32)
    out = out + b4_ref[...].astype(jnp.float32)
    o_ref[...] = out.astype(o_ref.dtype)


def _prepare_params(params, compute_dtype):
    """Zero-pad to MXU/lane-aligned shapes and cast to the compute dtype.

    Padded rows/cols are zero, so they contribute nothing to the real outputs:
    padded hidden lanes stay exactly 0 through every ReLU layer, and output
    lanes 2..127 stay exactly 0.
    """
    w1 = jnp.pad(params["w1"], ((0, 0), (0, H_PAD - H_DIM)))
    b1 = jnp.pad(params["b1"], ((0, 0), (0, H_PAD - H_DIM)))
    w2 = jnp.pad(params["w2"], ((0, H_PAD - H_DIM), (0, H_PAD - H_DIM)))
    b2 = jnp.pad(params["b2"], ((0, 0), (0, H_PAD - H_DIM)))
    w3 = jnp.pad(params["w3"], ((0, H_PAD - H_DIM), (0, H_PAD - H_DIM)))
    b3 = jnp.pad(params["b3"], ((0, 0), (0, H_PAD - H_DIM)))
    w4 = jnp.pad(params["w4"], ((0, H_PAD - H_DIM), (0, OUT_PAD - OUT_DIM)))
    b4 = jnp.pad(params["b4"], ((0, 0), (0, OUT_PAD - OUT_DIM)))
    cast = lambda x: x.astype(compute_dtype)
    return (cast(w1), cast(b1), cast(w2), cast(b2),
            cast(w3), cast(b3), cast(w4), cast(b4))


def generator_forward(z, params, *, tile_b=512, compute_dtype=jnp.float32):
    """z: (B, 2).  params: dict of pre-transposed weights / 2-D biases.

    tile_b: batch tile (rows per grid step).  Use 256-512 for large batches;
    it auto-shrinks for small batches.  compute_dtype=jnp.bfloat16 is
    recommended on v6e/v7x (accumulation stays f32).
    """
    B = z.shape[0]
    assert z.shape[1] == IN_DIM

    # Adapt the tile to small batches; keep it a multiple of 8 (sublane rule).
    tile_b = min(tile_b, _round_up(B, 8))
    assert tile_b % 8 == 0, "tile_b must be a multiple of 8"

    B_pad = _round_up(B, tile_b)
    if B_pad != B:
        z = jnp.pad(z, ((0, B_pad - B), (0, 0)))

    w1, b1, w2, b2, w3, b3, w4, b4 = _prepare_params(params, compute_dtype)

    full = lambda shape: pl.BlockSpec(shape, lambda i: (0, 0))

    out = pl.pallas_call(
        _mlp_kernel,
        out_shape=jax.ShapeDtypeStruct((B_pad, OUT_PAD), z.dtype),
        grid_spec=pltpu.PrefetchScalarGridSpec(
            num_scalar_prefetch=0,
            grid=(B_pad // tile_b,),
            in_specs=[
                pl.BlockSpec((tile_b, IN_DIM), lambda i: (i, 0)),   # z tile
                full(w1.shape), full(b1.shape),
                full(w2.shape), full(b2.shape),
                full(w3.shape), full(b3.shape),
                full(w4.shape), full(b4.shape),
            ],
            out_specs=pl.BlockSpec((tile_b, OUT_PAD), lambda i: (i, 0)),
        ),
        compiler_params=pltpu.CompilerParams(
            dimension_semantics=("parallel",),   # megacore-shardable on v7x
        ),
    )(z, w1, b1, w2, b2, w3, b3, w4, b4)

    # Strip batch padding and the lane padding of the output.
    return out[:B, :OUT_DIM]


def init_params(key):
    """Deterministic init mimicking torch.nn.Linear defaults
    (U[-1/sqrt(fan_in), +1/sqrt(fan_in)]).  Weights stored as (in, out)."""
    dims = [(IN_DIM, H_DIM), (H_DIM, H_DIM), (H_DIM, H_DIM), (H_DIM, OUT_DIM)]
    params = {}
    for idx, (fan_in, fan_out) in enumerate(dims, start=1):
        key, kw, kb = jax.random.split(key, 3)
        bound = 1.0 / jnp.sqrt(jnp.float32(fan_in))
        params[f"w{idx}"] = jax.random.uniform(
            kw, (fan_in, fan_out), jnp.float32, -bound, bound)
        params[f"b{idx}"] = jax.random.uniform(
            kb, (1, fan_out), jnp.float32, -bound, bound)
    return params


def reference_forward(z, params):
    h = jnp.maximum(z @ params["w1"] + params["b1"], 0.0)
    h = jnp.maximum(h @ params["w2"] + params["b2"], 0.0)
    h = jnp.maximum(h @ params["w3"] + params["b3"], 0.0)
    return h @ params["w4"] + params["b4"]


if __name__ == "__main__":
    key = jax.random.PRNGKey(0)
    kz, kz2, kp = jax.random.split(key, 3)
    params = init_params(kp)

    # Small latent batch (matches the module's 2-D latent codes).
    batch = 8
    z = jax.random.normal(kz, (batch, IN_DIM), jnp.float32)
    out = jax.block_until_ready(generator_forward(z, params))
    ref = reference_forward(z, params)
    assert out.shape == (batch, OUT_DIM)
    assert jnp.allclose(out, ref, atol=1e-4, rtol=1e-4), "mismatch vs reference"

    # Exercise batch padding + a multi-program grid (non-multiple batch).
    batch2 = 200
    z2 = jax.random.normal(kz2, (batch2, IN_DIM), jnp.float32)
    out2 = jax.block_until_ready(generator_forward(z2, params, tile_b=64))
    ref2 = reference_forward(z2, params)
    assert out2.shape == (batch2, OUT_DIM)
    assert jnp.allclose(out2, ref2, atol=1e-4, rtol=1e-4), "mismatch vs reference (tiled)"

    print("KERNEL_OK")
</pallas_src>

<mosaic_0001>
module attributes {stable_mosaic.version = 11 : i64} {
  func.func @_mlp_kernel(%arg0: i32, %arg1: memref<8x2xf32, #tpu.memory_space<vmem>>, %arg2: memref<2x512xf32, #tpu.memory_space<vmem>>, %arg3: memref<1x512xf32, #tpu.memory_space<vmem>>, %arg4: memref<512x512xf32, #tpu.memory_space<vmem>>, %arg5: memref<1x512xf32, #tpu.memory_space<vmem>>, %arg6: memref<512x512xf32, #tpu.memory_space<vmem>>, %arg7: memref<1x512xf32, #tpu.memory_space<vmem>>, %arg8: memref<512x128xf32, #tpu.memory_space<vmem>>, %arg9: memref<1x128xf32, #tpu.memory_space<vmem>>, %arg10: memref<8x128xf32, #tpu.memory_space<vmem>>) attributes {dimension_semantics = [#tpu.dimension_semantics<parallel>], iteration_bounds = array<i64: 1>, scalar_prefetch = 0 : i64, scratch_operands = 0 : i64, tpu.core_type = #tpu.core_type<tc>, window_params = [{transform_indices = @transform_0, window_bounds = array<i64: 8, 2>}, {pipeline_mode = #tpu.pipeline_mode<synchronous>, transform_indices = @transform_1, window_bounds = array<i64: 2, 512>}, {pipeline_mode = #tpu.pipeline_mode<synchronous>, transform_indices = @transform_2, window_bounds = array<i64: 1, 512>}, {pipeline_mode = #tpu.pipeline_mode<synchronous>, transform_indices = @transform_3, window_bounds = array<i64: 512, 512>}, {pipeline_mode = #tpu.pipeline_mode<synchronous>, transform_indices = @transform_4, window_bounds = array<i64: 1, 512>}, {pipeline_mode = #tpu.pipeline_mode<synchronous>, transform_indices = @transform_5, window_bounds = array<i64: 512, 512>}, {pipeline_mode = #tpu.pipeline_mode<synchronous>, transform_indices = @transform_6, window_bounds = array<i64: 1, 512>}, {pipeline_mode = #tpu.pipeline_mode<synchronous>, transform_indices = @transform_7, window_bounds = array<i64: 512, 128>}, {pipeline_mode = #tpu.pipeline_mode<synchronous>, transform_indices = @transform_8, window_bounds = array<i64: 1, 128>}, {transform_indices = @transform_9, window_bounds = array<i64: 8, 128>}]} {
    %c0 = arith.constant 0 : index
    %c0_0 = arith.constant 0 : index
    %0 = vector.load %arg1[%c0, %c0_0] : memref<8x2xf32, #tpu.memory_space<vmem>>, vector<8x2xf32>
    %1 = vector.extract_strided_slice %0 {offsets = [0, 0], sizes = [8, 1], strides = [1, 1]} : vector<8x2xf32> to vector<8x1xf32>
    %c0_1 = arith.constant 0 : index
    %c0_2 = arith.constant 0 : index
    %2 = vector.load %arg2[%c0_1, %c0_2] : memref<2x512xf32, #tpu.memory_space<vmem>>, vector<1x512xf32>
    %3 = vector.broadcast %1 : vector<8x1xf32> to vector<8x512xf32>
    %4 = vector.broadcast %2 : vector<1x512xf32> to vector<8x512xf32>
    %5 = arith.mulf %3, %4 : vector<8x512xf32>
    %6 = vector.extract_strided_slice %0 {offsets = [0, 1], sizes = [8, 1], strides = [1, 1]} : vector<8x2xf32> to vector<8x1xf32>
    %c1 = arith.constant 1 : index
    %c0_3 = arith.constant 0 : index
    %7 = vector.load %arg2[%c1, %c0_3] : memref<2x512xf32, #tpu.memory_space<vmem>>, vector<1x512xf32>
    %8 = vector.broadcast %6 : vector<8x1xf32> to vector<8x512xf32>
    %9 = vector.broadcast %7 : vector<1x512xf32> to vector<8x512xf32>
    %10 = arith.mulf %8, %9 : vector<8x512xf32>
    %11 = arith.addf %5, %10 : vector<8x512xf32>
    %c0_4 = arith.constant 0 : index
    %c0_5 = arith.constant 0 : index
    %12 = vector.load %arg3[%c0_4, %c0_5] : memref<1x512xf32, #tpu.memory_space<vmem>>, vector<1x512xf32>
    %13 = vector.broadcast %12 : vector<1x512xf32> to vector<8x512xf32>
    %14 = arith.addf %11, %13 : vector<8x512xf32>
    %cst = arith.constant 0.000000e+00 : f32
    %15 = vector.broadcast %cst : f32 to vector<8x512xf32>
    %16 = arith.maximumf %14, %15 : vector<8x512xf32>
    %c0_6 = arith.constant 0 : index
    %c0_7 = arith.constant 0 : index
    %17 = vector.load %arg4[%c0_6, %c0_7] : memref<512x512xf32, #tpu.memory_space<vmem>>, vector<512x512xf32>
    %cst_8 = arith.constant dense<0.000000e+00> : vector<8x512xf32>
    %18 = tpu.matmul %16, %17, %cst_8 {dimension_numbers = #tpu.dot_dimension_numbers<[1], [0], [0], [1], [0, 0, 1, 1], [], []>} : vector<8x512xf32>, vector<512x512xf32>, vector<8x512xf32> -> vector<8x512xf32>
    %c0_9 = arith.constant 0 : index
    %c0_10 = arith.constant 0 : index
    %19 = vector.load %arg5[%c0_9, %c0_10] : memref<1x512xf32, #tpu.memory_space<vmem>>, vector<1x512xf32>
    %20 = vector.broadcast %19 : vector<1x512xf32> to vector<8x512xf32>
    %21 = arith.addf %18, %20 : vector<8x512xf32>
    %cst_11 = arith.constant 0.000000e+00 : f32
    %22 = vector.broadcast %cst_11 : f32 to vector<8x512xf32>
    %23 = arith.maximumf %21, %22 : vector<8x512xf32>
    %c0_12 = arith.constant 0 : index
    %c0_13 = arith.constant 0 : index
    %24 = vector.load %arg6[%c0_12, %c0_13] : memref<512x512xf32, #tpu.memory_space<vmem>>, vector<512x512xf32>
    %cst_14 = arith.constant dense<0.000000e+00> : vector<8x512xf32>
    %25 = tpu.matmul %23, %24, %cst_14 {dimension_numbers = #tpu.dot_dimension_numbers<[1], [0], [0], [1], [0, 0, 1, 1], [], []>} : vector<8x512xf32>, vector<512x512xf32>, vector<8x512xf32> -> vector<8x512xf32>
    %c0_15 = arith.constant 0 : index
    %c0_16 = arith.constant 0 : index
    %26 = vector.load %arg7[%c0_15, %c0_16] : memref<1x512xf32, #tpu.memory_space<vmem>>, vector<1x512xf32>
    %27 = vector.broadcast %26 : vector<1x512xf32> to vector<8x512xf32>
    %28 = arith.addf %25, %27 : vector<8x512xf32>
    %cst_17 = arith.constant 0.000000e+00 : f32
    %29 = vector.broadcast %cst_17 : f32 to vector<8x512xf32>
    %30 = arith.maximumf %28, %29 : vector<8x512xf32>
    %c0_18 = arith.constant 0 : index
    %c0_19 = arith.constant 0 : index
    %31 = vector.load %arg8[%c0_18, %c0_19] : memref<512x128xf32, #tpu.memory_space<vmem>>, vector<512x128xf32>
    %cst_20 = arith.constant dense<0.000000e+00> : vector<8x128xf32>
    %32 = tpu.matmul %30, %31, %cst_20 {dimension_numbers = #tpu.dot_dimension_numbers<[1], [0], [0], [1], [0, 0, 1, 1], [], []>} : vector<8x512xf32>, vector<512x128xf32>, vector<8x128xf32> -> vector<8x128xf32>
    %c0_21 = arith.constant 0 : index
    %c0_22 = arith.constant 0 : index
    %33 = vector.load %arg9[%c0_21, %c0_22] : memref<1x128xf32, #tpu.memory_space<vmem>>, vector<1x128xf32>
    %34 = vector.broadcast %33 : vector<1x128xf32> to vector<8x128xf32>
    %35 = arith.addf %32, %34 : vector<8x128xf32>
    %c0_23 = arith.constant 0 : index
    %c0_24 = arith.constant 0 : index
    %36 = vector.load %arg10[%c0_23, %c0_24] : memref<8x128xf32, #tpu.memory_space<vmem>>, vector<8x128xf32>
    tpu.vector_store %arg10[%c0_23, %c0_24], %35 {strides = array<i32>} : memref<8x128xf32, #tpu.memory_space<vmem>>, vector<8x128xf32>,
    return
  }
  func.func @transform_0(%arg0: i32) -> (i32, i32) {
    %c0_i32 = arith.constant 0 : i32
    %c0_i32_0 = arith.constant 0 : i32
    return %arg0, %c0_i32 : i32, i32
  }
  func.func @transform_1(%arg0: i32) -> (i32, i32) {
    %c0_i32 = arith.constant 0 : i32
    %c0_i32_0 = arith.constant 0 : i32
    %c0_i32_1 = arith.constant 0 : i32
    return %c0_i32, %c0_i32_0 : i32, i32
  }
  func.func @transform_2(%arg0: i32) -> (i32, i32) {
    %c0_i32 = arith.constant 0 : i32
    %c0_i32_0 = arith.constant 0 : i32
    %c0_i32_1 = arith.constant 0 : i32
    return %c0_i32, %c0_i32_0 : i32, i32
  }
  func.func @transform_3(%arg0: i32) -> (i32, i32) {
    %c0_i32 = arith.constant 0 : i32
    %c0_i32_0 = arith.constant 0 : i32
    %c0_i32_1 = arith.constant 0 : i32
    return %c0_i32, %c0_i32_0 : i32, i32
  }
  func.func @transform_4(%arg0: i32) -> (i32, i32) {
    %c0_i32 = arith.constant 0 : i32
    %c0_i32_0 = arith.constant 0 : i32
    %c0_i32_1 = arith.constant 0 : i32
    return %c0_i32, %c0_i32_0 : i32, i32
  }
  func.func @transform_5(%arg0: i32) -> (i32, i32) {
    %c0_i32 = arith.constant 0 : i32
    %c0_i32_0 = arith.constant 0 : i32
    %c0_i32_1 = arith.constant 0 : i32
    return %c0_i32, %c0_i32_0 : i32, i32
  }
  func.func @transform_6(%arg0: i32) -> (i32, i32) {
    %c0_i32 = arith.constant 0 : i32
    %c0_i32_0 = arith.constant 0 : i32
    %c0_i32_1 = arith.constant 0 : i32
    return %c0_i32, %c0_i32_0 : i32, i32
  }
  func.func @transform_7(%arg0: i32) -> (i32, i32) {
    %c0_i32 = arith.constant 0 : i32
    %c0_i32_0 = arith.constant 0 : i32
    %c0_i32_1 = arith.constant 0 : i32
    return %c0_i32, %c0_i32_0 : i32, i32
  }
  func.func @transform_8(%arg0: i32) -> (i32, i32) {
    %c0_i32 = arith.constant 0 : i32
    %c0_i32_0 = arith.constant 0 : i32
    %c0_i32_1 = arith.constant 0 : i32
    return %c0_i32, %c0_i32_0 : i32, i32
  }
  func.func @transform_9(%arg0: i32) -> (i32, i32) {
    %c0_i32 = arith.constant 0 : i32
    %c0_i32_0 = arith.constant 0 : i32
    return %arg0, %c0_i32 : i32, i32
  }
}

</mosaic_0001>

<llo_original>
// kernel: tpu_custom_call.1
$region0: #{tpu_custom_call.1}
  #allocation0 [shape = 'u32[]', space=smem, size = 0x4, offset = 0x4, fixed_abs, tag = 'smem constant byte address 0x4 - core index']
  #allocation1 [shape = 'u32[144,128]{1,0:T(1,128)}', space=vmem, size = 0x12000, scoped, tag = 'internal scratch']
  %s0 = inlined_call_operand.vmem [shape: f32[8,2], index: 0, kind: input, shape index: {}]
  %s1 = inlined_call_operand.vmem [shape: f32[2,512], index: 1, kind: input, shape index: {}]
  %s2 = inlined_call_operand.vmem [shape: f32[1,512], index: 2, kind: input, shape index: {}]
  %s3 = inlined_call_operand.hbm [shape: f32[512,512], index: 3, kind: input, shape index: {}]
  %s4 = inlined_call_operand.vmem [shape: f32[1,512], index: 4, kind: input, shape index: {}]
  %s5 = inlined_call_operand.hbm [shape: f32[512,512], index: 5, kind: input, shape index: {}]
  %s6 = inlined_call_operand.vmem [shape: f32[1,512], index: 6, kind: input, shape index: {}]
  %s7 = inlined_call_operand.hbm [shape: f32[512,128], index: 7, kind: input, shape index: {}]
  %s8 = inlined_call_operand.vmem [shape: f32[1,128], index: 8, kind: input, shape index: {}]
  %s9 = inlined_call_operand.hbm [shape: f32[8,128], index: 9, kind: output, shape index: {}]
  %s10 = sld [smem:[#allocation0]]
  $region58: #{tpu_custom_call.1} parent=0
    _
  %s12 = ssub.s32 1, %s10
  %s13 = scalar_select 0, %s12, %s10
  $region1: #{tpu_custom_call.1} parent=0
    #allocation2 [shape = 'u8[1048576]{0}', space=vmem, size = 0x100000, scoped, tag = 'input window, operand 3, single buffered']
    #allocation3 [shape = 's32[1]{0}', space=sflag, size = 0x4, scoped, tag = 'scoped memory for tpu_custom_call.1']
    #allocation4 [shape = 's32[1]{0}', space=sflag, size = 0x4, scoped, tag = 'scoped memory for tpu_custom_call.1']
    #allocation5 [shape = 'u8[1048576]{0}', space=vmem, size = 0x100000, scoped, tag = 'input window, operand 5, single buffered']
    #allocation6 [shape = 's32[1]{0}', space=sflag, size = 0x4, scoped, tag = 'scoped memory for tpu_custom_call.1']
    #allocation7 [shape = 'u8[262144]{0}', space=vmem, size = 0x40000, scoped, tag = 'input window, operand 7, single buffered']
    #allocation8 [shape = 'u8[4096]{0}', space=vmem, size = 0x1000, scoped, tag = 'output window, operand 0, single buffered']
    %14 = vsyncpa [#allocation3], 0
    %15 = vsyncpa [#allocation6], 0
    %16 = vsyncpa [#allocation4], 0
    // Predicated region
    $region2: #{tpu_custom_call.1} parent=1 // pred_check
      _
    $region3: #{tpu_custom_call.1} parent=1 // pred_check_branch
      %18 = sbr.rel (0) target = $region5
    $region4: #{tpu_custom_call.1} parent=1 // pred_region
      _
    $region5: #{tpu_custom_call.1} parent=1 // pred_fallthru
      _
    // Predicated region
    $region6: #{tpu_custom_call.1} parent=1 // pred_check
      _
    $region7: #{tpu_custom_call.1} parent=1 // pred_check_branch
      %20 = sbr.rel (0) target = $region9
    $region8: #{tpu_custom_call.1} parent=1 // pred_region
      _
    $region9: #{tpu_custom_call.1} parent=1 // pred_fallthru
      _
    // Predicated region
    $region10: #{tpu_custom_call.1} parent=1 // pred_check
      _
    $region11: #{tpu_custom_call.1} parent=1 // pred_check_branch
      %22 = sbr.rel (0) target = $region13
    $region12: #{tpu_custom_call.1} parent=1 // pred_region
      _
    $region13: #{tpu_custom_call.1} parent=1 // pred_fallthru
      _
    // Predicated region
    $region14: #{tpu_custom_call.1} parent=1 // pred_check
      _
    $region15: #{tpu_custom_call.1} parent=1 // pred_check_branch
      %24 = sbr.rel (0) target = $region17
    $region16: #{tpu_custom_call.1} parent=1 // pred_region
      %s26 = ssub.s32 32768, 32768
      %27 = vsyncadd [#allocation3], %s26
      %s28 = sshll.u32 [#allocation2], 4
      %s29 = int_to_ptr.vmem [resolvable:$true] %s28
      %34 = dma.hbm_to_vmem [thread:$0]  %s3, 32768, %s29, [#allocation3], 512, 512, 32
    $region17: #{tpu_custom_call.1} parent=1 // pred_fallthru
      _
    // Predicated region
    $region18: #{tpu_custom_call.1} parent=1 // pred_check
      _
    $region19: #{tpu_custom_call.1} parent=1 // pred_check_branch
      %36 = sbr.rel (0) target = $region21
    $region20: #{tpu_custom_call.1} parent=1 // pred_region
      _
    $region21: #{tpu_custom_call.1} parent=1 // pred_fallthru
      _
    // Predicated region
    $region22: #{tpu_custom_call.1} parent=1 // pred_check
      _
    $region23: #{tpu_custom_call.1} parent=1 // pred_check_branch
      %38 = sbr.rel (0) target = $region25
    $region24: #{tpu_custom_call.1} parent=1 // pred_region
      %s40 = ssub.s32 32768, 32768
      %41 = vsyncadd [#allocation6], %s40
      %s42 = sshll.u32 [#allocation5], 4
      %s43 = int_to_ptr.vmem [resolvable:$true] %s42
      %48 = dma.hbm_to_vmem [thread:$0]  %s5, 32768, %s43, [#allocation6], 512, 512, 32
    $region25: #{tpu_custom_call.1} parent=1 // pred_fallthru
      _
    // Predicated region
    $region26: #{tpu_custom_call.1} parent=1 // pred_check
      _
    $region27: #{tpu_custom_call.1} parent=1 // pred_check_branch
      %50 = sbr.rel (0) target = $region29
    $region28: #{tpu_custom_call.1} parent=1 // pred_region
      _
    $region29: #{tpu_custom_call.1} parent=1 // pred_fallthru
      _
    // Predicated region
    $region30: #{tpu_custom_call.1} parent=1 // pred_check
      _
    $region31: #{tpu_custom_call.1} parent=1 // pred_check_branch
      %52 = sbr.rel (0) target = $region33
    $region32: #{tpu_custom_call.1} parent=1 // pred_region
      %s54 = ssub.s32 8192, 8192
      %55 = vsyncadd [#allocation6], %s54
      %s56 = sshll.u32 [#allocation7], 4
      %s57 = int_to_ptr.vmem [resolvable:$true] %s56
      %62 = dma.hbm_to_vmem [thread:$0]  %s7, 8192, %s57, [#allocation6], 128, 128, 8
    $region33: #{tpu_custom_call.1} parent=1 // pred_fallthru
      _
    // Predicated region
    $region34: #{tpu_custom_call.1} parent=1 // pred_check
      _
    $region35: #{tpu_custom_call.1} parent=1 // pred_check_branch
      %64 = sbr.rel (0) target = $region37
    $region36: #{tpu_custom_call.1} parent=1 // pred_region
      _
    $region37: #{tpu_custom_call.1} parent=1 // pred_fallthru
      _
    // Predicated region
    $region38: #{tpu_custom_call.1} parent=1 // pred_check
      _
    $region39: #{tpu_custom_call.1} parent=1 // pred_check_branch
      %66 = sbr.rel (0) target = $region41
    $region40: #{tpu_custom_call.1} parent=1 // pred_region
      %67 = dma.done [#allocation3], 32768
    $region41: #{tpu_custom_call.1} parent=1 // pred_fallthru
      _
    // Predicated region
    $region42: #{tpu_custom_call.1} parent=1 // pred_check
      _
    $region43: #{tpu_custom_call.1} parent=1 // pred_check_branch
      %69 = sbr.rel (0) target = $region45
    $region44: #{tpu_custom_call.1} parent=1 // pred_region
      %70 = dma.done [#allocation6], 32768
    $region45: #{tpu_custom_call.1} parent=1 // pred_fallthru
      _
    // Predicated region
    $region46: #{tpu_custom_call.1} parent=1 // pred_check
      _
    $region47: #{tpu_custom_call.1} parent=1 // pred_check_branch
      %72 = sbr.rel (0) target = $region49
    $region48: #{tpu_custom_call.1} parent=1 // pred_region
      %73 = dma.done [#allocation6], 8192
    $region49: #{tpu_custom_call.1} parent=1 // pred_fallthru
      _
    %v74 = vld [vmem:[%s0] sm:$0xff]
    %v75 = vld [vmem:[%s1] ss:$2 sm:$0xf]
    %77 = vset.pattern.permute.xlu0 0
    %78 = vperm.xlu0 %77, %v74
    %v79 = vpop.permute.xlu0 %78
    %v82 = vlaneseq
    %v83 = vshrl.u32 %v82, 7
    %v84 = vsub.s32 0, %v83
    %v85 = vrot.slane %v75, %v84
    %v86 = vlaneseq
    %v87 = vshrl.u32 %v86, 7
    %v88 = vsub.s32 1, %v87
    %v89 = vrot.slane %v75, %v88
    %v90 = vlaneseq
    %v91 = vshrl.u32 %v90, 7
    %v92 = vsub.s32 2, %v91
    %v93 = vrot.slane %v75, %v92
    %v94 = vlaneseq
    %v95 = vshrl.u32 %v94, 7
    %v96 = vsub.s32 3, %v95
    %v97 = vrot.slane %v75, %v96
    %v102 = vmul.f32 %v79, %v85
    %v103 = vmul.f32 %v79, %v89
    %v104 = vmul.f32 %v79, %v93
    %v105 = vmul.f32 %v79, %v97
    %s106 = scalar_lea.vmem %s1, 1
    %v107 = vld [vmem:[%s106] ss:$2 sm:$0xf]
    %108 = vset.pattern.permute.xlu0 1
    %109 = vperm.xlu0 %108, %v74
    %v110 = vpop.permute.xlu0 %109
    %v113 = vlaneseq
    %v114 = vshrl.u32 %v113, 7
    %v115 = vsub.s32 0, %v114
    %v116 = vrot.slane %v107, %v115
    %v117 = vlaneseq
    %v118 = vshrl.u32 %v117, 7
    %v119 = vsub.s32 1, %v118
    %v120 = vrot.slane %v107, %v119
    %v121 = vlaneseq
    %v122 = vshrl.u32 %v121, 7
    %v123 = vsub.s32 2, %v122
    %v124 = vrot.slane %v107, %v123
    %v125 = vlaneseq
    %v126 = vshrl.u32 %v125, 7
    %v127 = vsub.s32 3, %v126
    %v128 = vrot.slane %v107, %v127
    %v133 = vmul.f32 %v110, %v116
    %v134 = vmul.f32 %v110, %v120
    %v135 = vmul.f32 %v110, %v124
    %v136 = vmul.f32 %v110, %v128
    %v137 = vadd.f32 %v102, %v133
    %v138 = vadd.f32 %v103, %v134
    %v139 = vadd.f32 %v104, %v135
    %v140 = vadd.f32 %v105, %v136
    %v141 = vld [vmem:[%s2] sm:$0xf]
    %v143 = vlaneseq
    %v144 = vshrl.u32 %v143, 7
    %v145 = vsub.s32 0, %v144
    %v146 = vrot.slane %v141, %v145
    %v147 = vlaneseq
    %v148 = vshrl.u32 %v147, 7
    %v149 = vsub.s32 1, %v148
    %v150 = vrot.slane %v141, %v149
    %v151 = vlaneseq
    %v152 = vshrl.u32 %v151, 7
    %v153 = vsub.s32 2, %v152
    %v154 = vrot.slane %v141, %v153
    %v155 = vlaneseq
    %v156 = vshrl.u32 %v155, 7
    %v157 = vsub.s32 3, %v156
    %v158 = vrot.slane %v141, %v157
    %v163 = vadd.f32 %v137, %v146
    %v164 = vadd.f32 %v138, %v150
    %v165 = vadd.f32 %v139, %v154
    %v166 = vadd.f32 %v140, %v158
    %v167 = vmax.f32 %v163, 0.0
    %v168 = vmax.f32 %v164, 0.0
    %v169 = vmax.f32 %v165, 0.0
    %v170 = vmax.f32 %v166, 0.0
    %v171 = vld [vmem:[#allocation2] sm:$0xff]
    %v172 = vld [vmem:[#allocation2 + $0x8] sm:$0xff]
    %v173 = vld [vmem:[#allocation2 + $0x10] sm:$0xff]
    %v174 = vld [vmem:[#allocation2 + $0x18] sm:$0xff]
    %v175 = vld [vmem:[#allocation2 + $0x20] sm:$0xff]
    %v176 = vld [vmem:[#allocation2 + $0x28] sm:$0xff]
    %v177 = vld [vmem:[#allocation2 + $0x30] sm:$0xff]
    %v178 = vld [vmem:[#allocation2 + $0x38] sm:$0xff]
    %v179 = vld [vmem:[#allocation2 + $0x40] sm:$0xff]
    %v180 = vld [vmem:[#allocation2 + $0x48] sm:$0xff]
    %v181 = vld [vmem:[#allocation2 + $0x50] sm:$0xff]
    %v182 = vld [vmem:[#allocation2 + $0x58] sm:$0xff]
    %v183 = vld [vmem:[#allocation2 + $0x60] sm:$0xff]
    %v184 = vld [vmem:[#allocation2 + $0x68] sm:$0xff]
    %v185 = vld [vmem:[#allocation2 + $0x70] sm:$0xff]
    %v186 = vld [vmem:[#allocation2 + $0x78] sm:$0xff]
    %v187 = vld [vmem:[#allocation2 + $0x80] sm:$0xff]
    %v188 = vld [vmem:[#allocation2 + $0x88] sm:$0xff]
    %v189 = vld [vmem:[#allocation2 + $0x90] sm:$0xff]
    %v190 = vld [vmem:[#allocation2 + $0x98] sm:$0xff]
    %v191 = vld [vmem:[#allocation2 + $0xa0] sm:$0xff]
    %v192 = vld [vmem:[#allocation2 + $0xa8] sm:$0xff]
    %v193 = vld [vmem:[#allocation2 + $0xb0] sm:$0xff]
    %v194 = vld [vmem:[#allocation2 + $0xb8] sm:$0xff]
    %v195 = vld [vmem:[#allocation2 + $0xc0] sm:$0xff]
    %v196 = vld [vmem:[#allocation2 + $0xc8] sm:$0xff]
    %v197 = vld [vmem:[#allocation2 + $0xd0] sm:$0xff]
    %v198 = vld [vmem:[#allocation2 + $0xd8] sm:$0xff]
    %v199 = vld [vmem:[#allocation2 + $0xe0] sm:$0xff]
    %v200 = vld [vmem:[#allocation2 + $0xe8] sm:$0xff]
    %v201 = vld [vmem:[#allocation2 + $0xf0] sm:$0xff]
    %v202 = vld [vmem:[#allocation2 + $0xf8] sm:$0xff]
    %v203 = vld [vmem:[#allocation2 + $0x100] sm:$0xff]
    %v204 = vld [vmem:[#allocation2 + $0x108] sm:$0xff]
    %v205 = vld [vmem:[#allocation2 + $0x110] sm:$0xff]
    %v206 = vld [vmem:[#allocation2 + $0x118] sm:$0xff]
    %v207 = vld [vmem:[#allocation2 + $0x120] sm:$0xff]
    %v208 = vld [vmem:[#allocation2 + $0x128] sm:$0xff]
    %v209 = vld [vmem:[#allocation2 + $0x130] sm:$0xff]
    %v210 = vld [vmem:[#allocation2 + $0x138] sm:$0xff]
    %v211 = vld [vmem:[#allocation2 + $0x140] sm:$0xff]
    %v212 = vld [vmem:[#allocation2 + $0x148] sm:$0xff]
    %v213 = vld [vmem:[#allocation2 + $0x150] sm:$0xff]
    %v214 = vld [vmem:[#allocation2 + $0x158] sm:$0xff]
    %v215 = vld [vmem:[#allocation2 + $0x160] sm:$0xff]
    %v216 = vld [vmem:[#allocation2 + $0x168] sm:$0xff]
    %v217 = vld [vmem:[#allocation2 + $0x170] sm:$0xff]
    %v218 = vld [vmem:[#allocation2 + $0x178] sm:$0xff]
    %v219 = vld [vmem:[#allocation2 + $0x180] sm:$0xff]
    %v220 = vld [vmem:[#allocation2 + $0x188] sm:$0xff]
    %v221 = vld [vmem:[#allocation2 + $0x190] sm:$0xff]
    %v222 = vld [vmem:[#allocation2 + $0x198] sm:$0xff]
    %v223 = vld [vmem:[#allocation2 + $0x1a0] sm:$0xff]
    %v224 = vld [vmem:[#allocation2 + $0x1a8] sm:$0xff]
    %v225 = vld [vmem:[#allocation2 + $0x1b0] sm:$0xff]
    %v226 = vld [vmem:[#allocation2 + $0x1b8] sm:$0xff]
    %v227 = vld [vmem:[#allocation2 + $0x1c0] sm:$0xff]
    %v228 = vld [vmem:[#allocation2 + $0x1c8] sm:$0xff]
    %v229 = vld [vmem:[#allocation2 + $0x1d0] sm:$0xff]
    %v230 = vld [vmem:[#allocation2 + $0x1d8] sm:$0xff]
    %v231 = vld [vmem:[#allocation2 + $0x1e0] sm:$0xff]
    %v232 = vld [vmem:[#allocation2 + $0x1e8] sm:$0xff]
    %v233 = vld [vmem:[#allocation2 + $0x1f0] sm:$0xff]
    %v234 = vld [vmem:[#allocation2 + $0x1f8] sm:$0xff]
    %v235 = vld [vmem:[#allocation2 + $0x200] sm:$0xff]
    %v236 = vld [vmem:[#allocation2 + $0x208] sm:$0xff]
    %v237 = vld [vmem:[#allocation2 + $0x210] sm:$0xff]
    %v238 = vld [vmem:[#allocation2 + $0x218] sm:$0xff]
    %v239 = vld [vmem:[#allocation2 + $0x220] sm:$0xff]
    %v240 = vld [vmem:[#allocation2 + $0x228] sm:$0xff]
    %v241 = vld [vmem:[#allocation2 + $0x230] sm:$0xff]
    %v242 = vld [vmem:[#allocation2 + $0x238] sm:$0xff]
    %v243 = vld [vmem:[#allocation2 + $0x240] sm:$0xff]
    %v244 = vld [vmem:[#allocation2 + $0x248] sm:$0xff]
    %v245 = vld [vmem:[#allocation2 + $0x250] sm:$0xff]
    %v246 = vld [vmem:[#allocation2 + $0x258] sm:$0xff]
    %v247 = vld [vmem:[#allocation2 + $0x260] sm:$0xff]
    %v248 = vld [vmem:[#allocation2 + $0x268] sm:$0xff]
    %v249 = vld [vmem:[#allocation2 + $0x270] sm:$0xff]
    %v250 = vld [vmem:[#allocation2 + $0x278] sm:$0xff]
    %v251 = vld [vmem:[#allocation2 + $0x280] sm:$0xff]
    %v252 = vld [vmem:[#allocation2 + $0x288] sm:$0xff]
    %v253 = vld [vmem:[#allocation2 + $0x290] sm:$0xff]
    %v254 = vld [vmem:[#allocation2 + $0x298] sm:$0xff]
    %v255 = vld [vmem:[#allocation2 + $0x2a0] sm:$0xff]
    %v256 = vld [vmem:[#allocation2 + $0x2a8] sm:$0xff]
    %v257 = vld [vmem:[#allocation2 + $0x2b0] sm:$0xff]
    %v258 = vld [vmem:[#allocation2 + $0x2b8] sm:$0xff]
    %v259 = vld [vmem:[#allocation2 + $0x2c0] sm:$0xff]
    %v260 = vld [vmem:[#allocation2 + $0x2c8] sm:$0xff]
    %v261 = vld [vmem:[#allocation2 + $0x2d0] sm:$0xff]
    %v262 = vld [vmem:[#allocation2 + $0x2d8] sm:$0xff]
    %v263 = vld [vmem:[#allocation2 + $0x2e0] sm:$0xff]
    %v264 = vld [vmem:[#allocation2 + $0x2e8] sm:$0xff]
    %v265 = vld [vmem:[#allocation2 + $0x2f0] sm:$0xff]
    %v266 = vld [vmem:[#allocation2 + $0x2f8] sm:$0xff]
    %v267 = vld [vmem:[#allocation2 + $0x300] sm:$0xff]
    %v268 = vld [vmem:[#allocation2 + $0x308] sm:$0xff]
    %v269 = vld [vmem:[#allocation2 + $0x310] sm:$0xff]
    %v270 = vld [vmem:[#allocation2 + $0x318] sm:$0xff]
    %v271 = vld [vmem:[#allocation2 + $0x320] sm:$0xff]
    %v272 = vld [vmem:[#allocation2 + $0x328] sm:$0xff]
    %v273 = vld [vmem:[#allocation2 + $0x330] sm:$0xff]
    %v274 = vld [vmem:[#allocation2 + $0x338] sm:$0xff]
    %v275 = vld [vmem:[#allocation2 + $0x340] sm:$0xff]
    %v276 = vld [vmem:[#allocation2 + $0x348] sm:$0xff]
    %v277 = vld [vmem:[#allocation2 + $0x350] sm:$0xff]
    %v278 = vld [vmem:[#allocation2 + $0x358] sm:$0xff]
    %v279 = vld [vmem:[#allocation2 + $0x360] sm:$0xff]
    %v280 = vld [vmem:[#allocation2 + $0x368] sm:$0xff]
    %v281 = vld [vmem:[#allocation2 + $0x370] sm:$0xff]
    %v282 = vld [vmem:[#allocation2 + $0x378] sm:$0xff]
    %v283 = vld [vmem:[#allocation2 + $0x380] sm:$0xff]
    %v284 = vld [vmem:[#allocation2 + $0x388] sm:$0xff]
    %v285 = vld [vmem:[#allocation2 + $0x390] sm:$0xff]
    %v286 = vld [vmem:[#allocation2 + $0x398] sm:$0xff]
    %v287 = vld [vmem:[#allocation2 + $0x3a0] sm:$0xff]
    %v288 = vld [vmem:[#allocation2 + $0x3a8] sm:$0xff]
    %v289 = vld [vmem:[#allocation2 + $0x3b0] sm:$0xff]
    %v290 = vld [vmem:[#allocation2 + $0x3b8] sm:$0xff]
    %v291 = vld [vmem:[#allocation2 + $0x3c0] sm:$0xff]
    %v292 = vld [vmem:[#allocation2 + $0x3c8] sm:$0xff]
    %v293 = vld [vmem:[#allocation2 + $0x3d0] sm:$0xff]
    %v294 = vld [vmem:[#allocation2 + $0x3d8] sm:$0xff]
    %v295 = vld [vmem:[#allocation2 + $0x3e0] sm:$0xff]
    %v296 = vld [vmem:[#allocation2 + $0x3e8] sm:$0xff]
    %v297 = vld [vmem:[#allocation2 + $0x3f0] sm:$0xff]
    %v298 = vld [vmem:[#allocation2 + $0x3f8] sm:$0xff]
    %v299 = vld [vmem:[#allocation2 + $0x400] sm:$0xff]
    %v300 = vld [vmem:[#allocation2 + $0x408] sm:$0xff]
    %v301 = vld [vmem:[#allocation2 + $0x410] sm:$0xff]
    %v302 = vld [vmem:[#allocation2 + $0x418] sm:$0xff]
    %v303 = vld [vmem:[#allocation2 + $0x420] sm:$0xff]
    %v304 = vld [vmem:[#allocation2 + $0x428] sm:$0xff]
    %v305 = vld [vmem:[#allocation2 + $0x430] sm:$0xff]
    %v306 = vld [vmem:[#allocation2 + $0x438] sm:$0xff]
    %v307 = vld [vmem:[#allocation2 + $0x440] sm:$0xff]
    %v308 = vld [vmem:[#allocation2 + $0x448] sm:$0xff]
    %v309 = vld [vmem:[#allocation2 + $0x450] sm:$0xff]
    %v310 = vld [vmem:[#allocation2 + $0x458] sm:$0xff]
    %v311 = vld [vmem:[#allocation2 + $0x460] sm:$0xff]
    %v312 = vld [vmem:[#allocation2 + $0x468] sm:$0xff]
    %v313 = vld [vmem:[#allocation2 + $0x470] sm:$0xff]
    %v314 = vld [vmem:[#allocation2 + $0x478] sm:$0xff]
    %v315 = vld [vmem:[#allocation2 + $0x480] sm:$0xff]
    %v316 = vld [vmem:[#allocation2 + $0x488] sm:$0xff]
    %v317 = vld [vmem:[#allocation2 + $0x490] sm:$0xff]
    %v318 = vld [vmem:[#allocation2 + $0x498] sm:$0xff]
    %v319 = vld [vmem:[#allocation2 + $0x4a0] sm:$0xff]
    %v320 = vld [vmem:[#allocation2 + $0x4a8] sm:$0xff]
    %v321 = vld [vmem:[#allocation2 + $0x4b0] sm:$0xff]
    %v322 = vld [vmem:[#allocation2 + $0x4b8] sm:$0xff]
    %v323 = vld [vmem:[#allocation2 + $0x4c0] sm:$0xff]
    %v324 = vld [vmem:[#allocation2 + $0x4c8] sm:$0xff]
    %v325 = vld [vmem:[#allocation2 + $0x4d0] sm:$0xff]
    %v326 = vld [vmem:[#allocation2 + $0x4d8] sm:$0xff]
    %v327 = vld [vmem:[#allocation2 + $0x4e0] sm:$0xff]
    %v328 = vld [vmem:[#allocation2 + $0x4e8] sm:$0xff]
    %v329 = vld [vmem:[#allocation2 + $0x4f0] sm:$0xff]
    %v330 = vld [vmem:[#allocation2 + $0x4f8] sm:$0xff]
    %v331 = vld [vmem:[#allocation2 + $0x500] sm:$0xff]
    %v332 = vld [vmem:[#allocation2 + $0x508] sm:$0xff]
    %v333 = vld [vmem:[#allocation2 + $0x510] sm:$0xff]
    %v334 = vld [vmem:[#allocation2 + $0x518] sm:$0xff]
    %v335 = vld [vmem:[#allocation2 + $0x520] sm:$0xff]
    %v336 = vld [vmem:[#allocation2 + $0x528] sm:$0xff]
    %v337 = vld [vmem:[#allocation2 + $0x530] sm:$0xff]
    %v338 = vld [vmem:[#allocation2 + $0x538] sm:$0xff]
    %v339 = vld [vmem:[#allocation2 + $0x540] sm:$0xff]
    %v340 = vld [vmem:[#allocation2 + $0x548] sm:$0xff]
    %v341 = vld [vmem:[#allocation2 + $0x550] sm:$0xff]
    %v342 = vld [vmem:[#allocation2 + $0x558] sm:$0xff]
    %v343 = vld [vmem:[#allocation2 + $0x560] sm:$0xff]
    %v344 = vld [vmem:[#allocation2 + $0x568] sm:$0xff]
    %v345 = vld [vmem:[#allocation2 + $0x570] sm:$0xff]
    %v346 = vld [vmem:[#allocation2 + $0x578] sm:$0xff]
    %v347 = vld [vmem:[#allocation2 + $0x580] sm:$0xff]
    %v348 = vld [vmem:[#allocation2 + $0x588] sm:$0xff]
    %v349 = vld [vmem:[#allocation2 + $0x590] sm:$0xff]
    %v350 = vld [vmem:[#allocation2 + $0x598] sm:$0xff]
    %v351 = vld [vmem:[#allocation2 + $0x5a0] sm:$0xff]
    %v352 = vld [vmem:[#allocation2 + $0x5a8] sm:$0xff]
    %v353 = vld [vmem:[#allocation2 + $0x5b0] sm:$0xff]
    %v354 = vld [vmem:[#allocation2 + $0x5b8] sm:$0xff]
    %v355 = vld [vmem:[#allocation2 + $0x5c0] sm:$0xff]
    %v356 = vld [vmem:[#allocation2 + $0x5c8] sm:$0xff]
    %v357 = vld [vmem:[#allocation2 + $0x5d0] sm:$0xff]
    %v358 = vld [vmem:[#allocation2 + $0x5d8] sm:$0xff]
    %v359 = vld [vmem:[#allocation2 + $0x5e0] sm:$0xff]
    %v360 = vld [vmem:[#allocation2 + $0x5e8] sm:$0xff]
    %v361 = vld [vmem:[#allocation2 + $0x5f0] sm:$0xff]
    %v362 = vld [vmem:[#allocation2 + $0x5f8] sm:$0xff]
    %v363 = vld [vmem:[#allocation2 + $0x600] sm:$0xff]
    %v364 = vld [vmem:[#allocation2 + $0x608] sm:$0xff]
    %v365 = vld [vmem:[#allocation2 + $0x610] sm:$0xff]
    %v366 = vld [vmem:[#allocation2 + $0x618] sm:$0xff]
    %v367 = vld [vmem:[#allocation2 + $0x620] sm:$0xff]
    %v368 = vld [vmem:[#allocation2 + $0x628] sm:$0xff]
    %v369 = vld [vmem:[#allocation2 + $0x630] sm:$0xff]
    %v370 = vld [vmem:[#allocation2 + $0x638] sm:$0xff]
    %v371 = vld [vmem:[#allocation2 + $0x640] sm:$0xff]
    %v372 = vld [vmem:[#allocation2 + $0x648] sm:$0xff]
    %v373 = vld [vmem:[#allocation2 + $0x650] sm:$0xff]
    %v374 = vld [vmem:[#allocation2 + $0x658] sm:$0xff]
    %v375 = vld [vmem:[#allocation2 + $0x660] sm:$0xff]
    %v376 = vld [vmem:[#allocation2 + $0x668] sm:$0xff]
    %v377 = vld [vmem:[#allocation2 + $0x670] sm:$0xff]
    %v378 = vld [vmem:[#allocation2 + $0x678] sm:$0xff]
    %v379 = vld [vmem:[#allocation2 + $0x680] sm:$0xff]
    %v380 = vld [vmem:[#allocation2 + $0x688] sm:$0xff]
    %v381 = vld [vmem:[#allocation2 + $0x690] sm:$0xff]
    %v382 = vld [vmem:[#allocation2 + $0x698] sm:$0xff]
    %v383 = vld [vmem:[#allocation2 + $0x6a0] sm:$0xff]
    %v384 = vld [vmem:[#allocation2 + $0x6a8] sm:$0xff]
    %v385 = vld [vmem:[#allocation2 + $0x6b0] sm:$0xff]
    %v386 = vld [vmem:[#allocation2 + $0x6b8] sm:$0xff]
    %v387 = vld [vmem:[#allocation2 + $0x6c0] sm:$0xff]
    %v388 = vld [vmem:[#allocation2 + $0x6c8] sm:$0xff]
    %v389 = vld [vmem:[#allocation2 + $0x6d0] sm:$0xff]
    %v390 = vld [vmem:[#allocation2 + $0x6d8] sm:$0xff]
    %v391 = vld [vmem:[#allocation2 + $0x6e0] sm:$0xff]
    %v392 = vld [vmem:[#allocation2 + $0x6e8] sm:$0xff]
    %v393 = vld [vmem:[#allocation2 + $0x6f0] sm:$0xff]
    %v394 = vld [vmem:[#allocation2 + $0x6f8] sm:$0xff]
    %v395 = vld [vmem:[#allocation2 + $0x700] sm:$0xff]
    %v396 = vld [vmem:[#allocation2 + $0x708] sm:$0xff]
    %v397 = vld [vmem:[#allocation2 + $0x710] sm:$0xff]
    %v398 = vld [vmem:[#allocation2 + $0x718] sm:$0xff]
    %v399 = vld [vmem:[#allocation2 + $0x720] sm:$0xff]
    %v400 = vld [vmem:[#allocation2 + $0x728] sm:$0xff]
    %v401 = vld [vmem:[#allocation2 + $0x730] sm:$0xff]
    %v402 = vld [vmem:[#allocation2 + $0x738] sm:$0xff]
    %v403 = vld [vmem:[#allocation2 + $0x740] sm:$0xff]
    %v404 = vld [vmem:[#allocation2 + $0x748] sm:$0xff]
    %v405 = vld [vmem:[#allocation2 + $0x750] sm:$0xff]
    %v406 = vld [vmem:[#allocation2 + $0x758] sm:$0xff]
    %v407 = vld [vmem:[#allocation2 + $0x760] sm:$0xff]
    %v408 = vld [vmem:[#allocation2 + $0x768] sm:$0xff]
    %v409 = vld [vmem:[#allocation2 + $0x770] sm:$0xff]
    %v410 = vld [vmem:[#allocation2 + $0x778] sm:$0xff]
    %v411 = vld [vmem:[#allocation2 + $0x780] sm:$0xff]
    %v412 = vld [vmem:[#allocation2 + $0x788] sm:$0xff]
    %v413 = vld [vmem:[#allocation2 + $0x790] sm:$0xff]
    %v414 = vld [vmem:[#allocation2 + $0x798] sm:$0xff]
    %v415 = vld [vmem:[#allocation2 + $0x7a0] sm:$0xff]
    %v416 = vld [vmem:[#allocation2 + $0x7a8] sm:$0xff]
    %v417 = vld [vmem:[#allocation2 + $0x7b0] sm:$0xff]
    %v418 = vld [vmem:[#allocation2 + $0x7b8] sm:$0xff]
    %v419 = vld [vmem:[#allocation2 + $0x7c0] sm:$0xff]
    %v420 = vld [vmem:[#allocation2 + $0x7c8] sm:$0xff]
    %v421 = vld [vmem:[#allocation2 + $0x7d0] sm:$0xff]
    %v422 = vld [vmem:[#allocation2 + $0x7d8] sm:$0xff]
    %v423 = vld [vmem:[#allocation2 + $0x7e0] sm:$0xff]
    %v424 = vld [vmem:[#allocation2 + $0x7e8] sm:$0xff]
    %v425 = vld [vmem:[#allocation2 + $0x7f0] sm:$0xff]
    %v426 = vld [vmem:[#allocation2 + $0x7f8] sm:$0xff]
    %v427 = vld [vmem:[%s4] sm:$0xf]
    %v429 = vlaneseq
    %v430 = vshrl.u32 %v429, 7
    %v431 = vsub.s32 0, %v430
    %v432 = vrot.slane %v427, %v431
    %v433 = vlaneseq
    %v434 = vshrl.u32 %v433, 7
    %v435 = vsub.s32 1, %v434
    %v436 = vrot.slane %v427, %v435
    %v437 = vlaneseq
    %v438 = vshrl.u32 %v437, 7
    %v439 = vsub.s32 2, %v438
    %v440 = vrot.slane %v427, %v439
    %v441 = vlaneseq
    %v442 = vshrl.u32 %v441, 7
    %v443 = vsub.s32 3, %v442
    %v444 = vrot.slane %v427, %v443
    %449 = vmatprep.subr.mxu0 %v232
    %450 = vmatpush1.msra.mxu0 %v231
    %451 = vmatprep.subr.mxu0 %v228
    %452 = vmatpush1.msra.mxu0 %v227
    %453 = vmatprep.subr.mxu0 %v224
    %454 = vmatpush1.msra.mxu0 %v223
    %455 = vmatprep.subr.mxu0 %v220
    %456 = vmatpush1.msra.mxu0 %v219
    %457 = vmatprep.subr.mxu0 %v216
    %458 = vmatpush1.msra.mxu0 %v215
    %459 = vmatprep.subr.mxu0 %v212
    %460 = vmatpush1.msra.mxu0 %v211
    %461 = vmatprep.subr.mxu0 %v208
    %462 = vmatpush1.msra.mxu0 %v207
    %463 = vmatprep.subr.mxu0 %v204
    %464 = vmatpush1.msra.mxu0 %v203
    %465 = vmatprep.subr.mxu0 %v200
    %466 = vmatpush1.msra.mxu0 %v199
    %467 = vmatprep.subr.mxu0 %v196
    %468 = vmatpush1.msra.mxu0 %v195
    %469 = vmatprep.subr.mxu0 %v192
    %470 = vmatpush1.msra.mxu0 %v191
    %471 = vmatprep.subr.mxu0 %v188
    %472 = vmatpush1.msra.mxu0 %v187
    %473 = vmatprep.subr.mxu0 %v184
    %474 = vmatpush1.msra.mxu0 %v183
    %475 = vmatprep.subr.mxu0 %v180
    %476 = vmatpush1.msra.mxu0 %v179
    %477 = vmatprep.subr.mxu0 %v176
    %478 = vmatpush1.msra.mxu0 %v175
    %479 = vmatprep.subr.mxu0 %v172
    %480 = vmatpush1.msra.mxu0 %v171
    %481 = vmatprep.subr.mxu0 %v296
    %482 = vmatpush2.msra.mxu0 %v295
    %483 = vmatprep.subr.mxu0 %v292
    %484 = vmatpush2.msra.mxu0 %v291
    %485 = vmatprep.subr.mxu0 %v288
    %486 = vmatpush2.msra.mxu0 %v287
    %487 = vmatprep.subr.mxu0 %v284
    %488 = vmatpush2.msra.mxu0 %v283
    %489 = vmatprep.subr.mxu0 %v280
    %490 = vmatpush2.msra.mxu0 %v279
    %491 = vmatprep.subr.mxu0 %v276
    %492 = vmatpush2.msra.mxu0 %v275
    %493 = vmatprep.subr.mxu0 %v272
    %494 = vmatpush2.msra.mxu0 %v271
    %495 = vmatprep.subr.mxu0 %v268
    %496 = vmatpush2.msra.mxu0 %v267
    %497 = vmatprep.subr.mxu0 %v264
    %498 = vmatpush2.msra.mxu0 %v263
    %499 = vmatprep.subr.mxu0 %v260
    %500 = vmatpush2.msra.mxu0 %v259
    %501 = vmatprep.subr.mxu0 %v256
    %502 = vmatpush2.msra.mxu0 %v255
    %503 = vmatprep.subr.mxu0 %v252
    %504 = vmatpush2.msra.mxu0 %v251
    %505 = vmatprep.subr.mxu0 %v248
    %506 = vmatpush2.msra.mxu0 %v247
    %507 = vmatprep.subr.mxu0 %v244
    %508 = vmatpush2.msra.mxu0 %v243
    %509 = vmatprep.subr.mxu0 %v240
    %510 = vmatpush2.msra.mxu0 %v239
    %511 = vmatprep.subr.mxu0 %v236
    %512 = vmatpush2.msra.mxu0 %v235
    %513 = vmatprep.mubr.f32.mxu0 %v168
    %514 = vmatmul.mubr.f32.gmra.mxu0 %v167
    %v515 = vpop.f32.mrf.mxu0
    %v516 = vadd.f32 %v432, %v515
    %v517 = vpop.f32.mrf.mxu0
    %v518 = vadd.f32 %v436, %v517
    %519 = vdwg.mxu0
    %520 = vmatprep.subr.mxu0 %v360
    %521 = vmatpush1.msra.mxu0 %v359
    %522 = vmatprep.subr.mxu0 %v356
    %523 = vmatpush1.msra.mxu0 %v355
    %524 = vmatprep.subr.mxu0 %v352
    %525 = vmatpush1.msra.mxu0 %v351
    %526 = vmatprep.subr.mxu0 %v348
    %527 = vmatpush1.msra.mxu0 %v347
    %528 = vmatprep.subr.mxu0 %v344
    %529 = vmatpush1.msra.mxu0 %v343
    %530 = vmatprep.subr.mxu0 %v340
    %531 = vmatpush1.msra.mxu0 %v339
    %532 = vmatprep.subr.mxu0 %v336
    %533 = vmatpush1.msra.mxu0 %v335
    %534 = vmatprep.subr.mxu0 %v332
    %535 = vmatpush1.msra.mxu0 %v331
    %536 = vmatprep.subr.mxu0 %v328
    %537 = vmatpush1.msra.mxu0 %v327
    %538 = vmatprep.subr.mxu0 %v324
    %539 = vmatpush1.msra.mxu0 %v323
    %540 = vmatprep.subr.mxu0 %v320
    %541 = vmatpush1.msra.mxu0 %v319
    %542 = vmatprep.subr.mxu0 %v316
    %543 = vmatpush1.msra.mxu0 %v315
    %544 = vmatprep.subr.mxu0 %v312
    %545 = vmatpush1.msra.mxu0 %v311
    %546 = vmatprep.subr.mxu0 %v308
    %547 = vmatpush1.msra.mxu0 %v307
    %548 = vmatprep.subr.mxu0 %v304
    %549 = vmatpush1.msra.mxu0 %v303
    %550 = vmatprep.subr.mxu0 %v300
    %551 = vmatpush1.msra.mxu0 %v299
    %552 = vmatprep.subr.mxu0 %v424
    %553 = vmatpush2.msra.mxu0 %v423
    %554 = vmatprep.subr.mxu0 %v420
    %555 = vmatpush2.msra.mxu0 %v419
    %556 = vmatprep.subr.mxu0 %v416
    %557 = vmatpush2.msra.mxu0 %v415
    %558 = vmatprep.subr.mxu0 %v412
    %559 = vmatpush2.msra.mxu0 %v411
    %560 = vmatprep.subr.mxu0 %v408
    %561 = vmatpush2.msra.mxu0 %v407
    %562 = vmatprep.subr.mxu0 %v404
    %563 = vmatpush2.msra.mxu0 %v403
    %564 = vmatprep.subr.mxu0 %v400
    %565 = vmatpush2.msra.mxu0 %v399
    %566 = vmatprep.subr.mxu0 %v396
    %567 = vmatpush2.msra.mxu0 %v395
    %568 = vmatprep.subr.mxu0 %v392
    %569 = vmatpush2.msra.mxu0 %v391
    %570 = vmatprep.subr.mxu0 %v388
    %571 = vmatpush2.msra.mxu0 %v387
    %572 = vmatprep.subr.mxu0 %v384
    %573 = vmatpush2.msra.mxu0 %v383
    %574 = vmatprep.subr.mxu0 %v380
    %575 = vmatpush2.msra.mxu0 %v379
    %576 = vmatprep.subr.mxu0 %v376
    %577 = vmatpush2.msra.mxu0 %v375
    %578 = vmatprep.subr.mxu0 %v372
    %579 = vmatpush2.msra.mxu0 %v371
    %580 = vmatprep.subr.mxu0 %v368
    %581 = vmatpush2.msra.mxu0 %v367
    %582 = vmatprep.subr.mxu0 %v364
    %583 = vmatpush2.msra.mxu0 %v363
    %584 = vmatprep.mubr.f32.mxu0 %v170
    %585 = vmatmul.mubr.f32.gmra.mxu0 %v169
    %v586 = vpop.f32.mrf.mxu0
    %v587 = vadd.f32 %v516, %v586
    %v588 = vpop.f32.mrf.mxu0
    %v589 = vadd.f32 %v518, %v588
    %590 = vdwg.mxu0
    %591 = vmatprep.subr.mxu0 %v234
    %592 = vmatpush1.msra.mxu0 %v233
    %593 = vmatprep.subr.mxu0 %v230
    %594 = vmatpush1.msra.mxu0 %v229
    %595 = vmatprep.subr.mxu0 %v226
    %596 = vmatpush1.msra.mxu0 %v225
    %597 = vmatprep.subr.mxu0 %v222
    %598 = vmatpush1.msra.mxu0 %v221
    %599 = vmatprep.subr.mxu0 %v218
    %600 = vmatpush1.msra.mxu0 %v217
    %601 = vmatprep.subr.mxu0 %v214
    %602 = vmatpush1.msra.mxu0 %v213
    %603 = vmatprep.subr.mxu0 %v210
    %604 = vmatpush1.msra.mxu0 %v209
    %605 = vmatprep.subr.mxu0 %v206
    %606 = vmatpush1.msra.mxu0 %v205
    %607 = vmatprep.subr.mxu0 %v202
    %608 = vmatpush1.msra.mxu0 %v201
    %609 = vmatprep.subr.mxu0 %v198
    %610 = vmatpush1.msra.mxu0 %v197
    %611 = vmatprep.subr.mxu0 %v194
    %612 = vmatpush1.msra.mxu0 %v193
    %613 = vmatprep.subr.mxu0 %v190
    %614 = vmatpush1.msra.mxu0 %v189
    %615 = vmatprep.subr.mxu0 %v186
    %616 = vmatpush1.msra.mxu0 %v185
    %617 = vmatprep.subr.mxu0 %v182
    %618 = vmatpush1.msra.mxu0 %v181
    %619 = vmatprep.subr.mxu0 %v178
    %620 = vmatpush1.msra.mxu0 %v177
    %621 = vmatprep.subr.mxu0 %v174
    %622 = vmatpush1.msra.mxu0 %v173
    %623 = vmatprep.subr.mxu0 %v298
    %624 = vmatpush2.msra.mxu0 %v297
    %625 = vmatprep.subr.mxu0 %v294
    %626 = vmatpush2.msra.mxu0 %v293
    %627 = vmatprep.subr.mxu0 %v290
    %628 = vmatpush2.msra.mxu0 %v289
    %629 = vmatprep.subr.mxu0 %v286
    %630 = vmatpush2.msra.mxu0 %v285
    %631 = vmatprep.subr.mxu0 %v282
    %632 = vmatpush2.msra.mxu0 %v281
    %633 = vmatprep.subr.mxu0 %v278
    %634 = vmatpush2.msra.mxu0 %v277
    %635 = vmatprep.subr.mxu0 %v274
    %636 = vmatpush2.msra.mxu0 %v273
    %637 = vmatprep.subr.mxu0 %v270
    %638 = vmatpush2.msra.mxu0 %v269
    %639 = vmatprep.subr.mxu0 %v266
    %640 = vmatpush2.msra.mxu0 %v265
    %641 = vmatprep.subr.mxu0 %v262
    %642 = vmatpush2.msra.mxu0 %v261
    %643 = vmatprep.subr.mxu0 %v258
    %644 = vmatpush2.msra.mxu0 %v257
    %645 = vmatprep.subr.mxu0 %v254
    %646 = vmatpush2.msra.mxu0 %v253
    %647 = vmatprep.subr.mxu0 %v250
    %648 = vmatpush2.msra.mxu0 %v249
    %649 = vmatprep.subr.mxu0 %v246
    %650 = vmatpush2.msra.mxu0 %v245
    %651 = vmatprep.subr.mxu0 %v242
    %652 = vmatpush2.msra.mxu0 %v241
    %653 = vmatprep.subr.mxu0 %v238
    %654 = vmatpush2.msra.mxu0 %v237
    %655 = vmatprep.mubr.f32.mxu0 %v168
    %656 = vmatmul.mubr.f32.gmra.mxu0 %v167
    %v657 = vpop.f32.mrf.mxu0
    %v658 = vadd.f32 %v440, %v657
    %v659 = vpop.f32.mrf.mxu0
    %v660 = vadd.f32 %v444, %v659
    %661 = vdwg.mxu0
    %662 = vmatprep.subr.mxu0 %v362
    %663 = vmatpush1.msra.mxu0 %v361
    %664 = vmatprep.subr.mxu0 %v358
    %665 = vmatpush1.msra.mxu0 %v357
    %666 = vmatprep.subr.mxu0 %v354
    %667 = vmatpush1.msra.mxu0 %v353
    %668 = vmatprep.subr.mxu0 %v350
    %669 = vmatpush1.msra.mxu0 %v349
    %670 = vmatprep.subr.mxu0 %v346
    %671 = vmatpush1.msra.mxu0 %v345
    %672 = vmatprep.subr.mxu0 %v342
    %673 = vmatpush1.msra.mxu0 %v341
    %674 = vmatprep.subr.mxu0 %v338
    %675 = vmatpush1.msra.mxu0 %v337
    %676 = vmatprep.subr.mxu0 %v334
    %677 = vmatpush1.msra.mxu0 %v333
    %678 = vmatprep.subr.mxu0 %v330
    %679 = vmatpush1.msra.mxu0 %v329
    %680 = vmatprep.subr.mxu0 %v326
    %681 = vmatpush1.msra.mxu0 %v325
    %682 = vmatprep.subr.mxu0 %v322
    %683 = vmatpush1.msra.mxu0 %v321
    %684 = vmatprep.subr.mxu0 %v318
    %685 = vmatpush1.msra.mxu0 %v317
    %686 = vmatprep.subr.mxu0 %v314
    %687 = vmatpush1.msra.mxu0 %v313
    %688 = vmatprep.subr.mxu0 %v310
    %689 = vmatpush1.msra.mxu0 %v309
    %690 = vmatprep.subr.mxu0 %v306
    %691 = vmatpush1.msra.mxu0 %v305
    %692 = vmatprep.subr.mxu0 %v302
    %693 = vmatpush1.msra.mxu0 %v301
    %694 = vmatprep.subr.mxu0 %v426
    %695 = vmatpush2.msra.mxu0 %v425
    %696 = vmatprep.subr.mxu0 %v422
    %697 = vmatpush2.msra.mxu0 %v421
    %698 = vmatprep.subr.mxu0 %v418
    %699 = vmatpush2.msra.mxu0 %v417
    %700 = vmatprep.subr.mxu0 %v414
    %701 = vmatpush2.msra.mxu0 %v413
    %702 = vmatprep.subr.mxu0 %v410
    %703 = vmatpush2.msra.mxu0 %v409
    %704 = vmatprep.subr.mxu0 %v406
    %705 = vmatpush2.msra.mxu0 %v405
    %706 = vmatprep.subr.mxu0 %v402
    %707 = vmatpush2.msra.mxu0 %v401
    %708 = vmatprep.subr.mxu0 %v398
    %709 = vmatpush2.msra.mxu0 %v397
    %710 = vmatprep.subr.mxu0 %v394
    %711 = vmatpush2.msra.mxu0 %v393
    %712 = vmatprep.subr.mxu0 %v390
    %713 = vmatpush2.msra.mxu0 %v389
    %714 = vmatprep.subr.mxu0 %v386
    %715 = vmatpush2.msra.mxu0 %v385
    %716 = vmatprep.subr.mxu0 %v382
    %717 = vmatpush2.msra.mxu0 %v381
    %718 = vmatprep.subr.mxu0 %v378
    %719 = vmatpush2.msra.mxu0 %v377
    %720 = vmatprep.subr.mxu0 %v374
    %721 = vmatpush2.msra.mxu0 %v373
    %722 = vmatprep.subr.mxu0 %v370
    %723 = vmatpush2.msra.mxu0 %v369
    %724 = vmatprep.subr.mxu0 %v366
    %725 = vmatpush2.msra.mxu0 %v365
    %726 = vmatprep.mubr.f32.mxu0 %v170
    %727 = vmatmul.mubr.f32.gmra.mxu0 %v169
    %v728 = vpop.f32.mrf.mxu0
    %v729 = vadd.f32 %v658, %v728
    %v730 = vpop.f32.mrf.mxu0
    %v731 = vadd.f32 %v660, %v730
    %732 = vdwg.mxu0
    %v733 = vmax.f32 %v587, 0.0
    %v734 = vmax.f32 %v589, 0.0
    %v735 = vmax.f32 %v729, 0.0
    %v736 = vmax.f32 %v731, 0.0
    %v737 = vld [vmem:[#allocation5] sm:$0xff]
    %v738 = vld [vmem:[#allocation5 + $0x8] sm:$0xff]
    %v739 = vld [vmem:[#allocation5 + $0x10] sm:$0xff]
    %v740 = vld [vmem:[#allocation5 + $0x18] sm:$0xff]
    %v741 = vld [vmem:[#allocation5 + $0x20] sm:$0xff]
    %v742 = vld [vmem:[#allocation5 + $0x28] sm:$0xff]
    %v743 = vld [vmem:[#allocation5 + $0x30] sm:$0xff]
    %v744 = vld [vmem:[#allocation5 + $0x38] sm:$0xff]
    %v745 = vld [vmem:[#allocation5 + $0x40] sm:$0xff]
    %v746 = vld [vmem:[#allocation5 + $0x48] sm:$0xff]
    %v747 = vld [vmem:[#allocation5 + $0x50] sm:$0xff]
    %v748 = vld [vmem:[#allocation5 + $0x58] sm:$0xff]
    %v749 = vld [vmem:[#allocation5 + $0x60] sm:$0xff]
    %v750 = vld [vmem:[#allocation5 + $0x68] sm:$0xff]
    %v751 = vld [vmem:[#allocation5 + $0x70] sm:$0xff]
    %v752 = vld [vmem:[#allocation5 + $0x78] sm:$0xff]
    %v753 = vld [vmem:[#allocation5 + $0x80] sm:$0xff]
    %v754 = vld [vmem:[#allocation5 + $0x88] sm:$0xff]
    %v755 = vld [vmem:[#allocation5 + $0x90] sm:$0xff]
    %v756 = vld [vmem:[#allocation5 + $0x98] sm:$0xff]
    %v757 = vld [vmem:[#allocation5 + $0xa0] sm:$0xff]
    %v758 = vld [vmem:[#allocation5 + $0xa8] sm:$0xff]
    %v759 = vld [vmem:[#allocation5 + $0xb0] sm:$0xff]
    %v760 = vld [vmem:[#allocation5 + $0xb8] sm:$0xff]
    %v761 = vld [vmem:[#allocation5 + $0xc0] sm:$0xff]
    %v762 = vld [vmem:[#allocation5 + $0xc8] sm:$0xff]
    %v763 = vld [vmem:[#allocation5 + $0xd0] sm:$0xff]
    %v764 = vld [vmem:[#allocation5 + $0xd8] sm:$0xff]
    %v765 = vld [vmem:[#allocation5 + $0xe0] sm:$0xff]
    %v766 = vld [vmem:[#allocation5 + $0xe8] sm:$0xff]
    %v767 = vld [vmem:[#allocation5 + $0xf0] sm:$0xff]
    %v768 = vld [vmem:[#allocation5 + $0xf8] sm:$0xff]
    %v769 = vld [vmem:[#allocation5 + $0x100] sm:$0xff]
    %v770 = vld [vmem:[#allocation5 + $0x108] sm:$0xff]
    %v771 = vld [vmem:[#allocation5 + $0x110] sm:$0xff]
    %v772 = vld [vmem:[#allocation5 + $0x118] sm:$0xff]
    %v773 = vld [vmem:[#allocation5 + $0x120] sm:$0xff]
    %v774 = vld [vmem:[#allocation5 + $0x128] sm:$0xff]
    %v775 = vld [vmem:[#allocation5 + $0x130] sm:$0xff]
    %v776 = vld [vmem:[#allocation5 + $0x138] sm:$0xff]
    %v777 = vld [vmem:[#allocation5 + $0x140] sm:$0xff]
    %v778 = vld [vmem:[#allocation5 + $0x148] sm:$0xff]
    %v779 = vld [vmem:[#allocation5 + $0x150] sm:$0xff]
    %v780 = vld [vmem:[#allocation5 + $0x158] sm:$0xff]
    %v781 = vld [vmem:[#allocation5 + $0x160] sm:$0xff]
    %v782 = vld [vmem:[#allocation5 + $0x168] sm:$0xff]
    %v783 = vld [vmem:[#allocation5 + $0x170] sm:$0xff]
    %v784 = vld [vmem:[#allocation5 + $0x178] sm:$0xff]
    %v785 = vld [vmem:[#allocation5 + $0x180] sm:$0xff]
    %v786 = vld [vmem:[#allocation5 + $0x188] sm:$0xff]
    %v787 = vld [vmem:[#allocation5 + $0x190] sm:$0xff]
    %v788 = vld [vmem:[#allocation5 + $0x198] sm:$0xff]
    %v789 = vld [vmem:[#allocation5 + $0x1a0] sm:$0xff]
    %v790 = vld [vmem:[#allocation5 + $0x1a8] sm:$0xff]
    %v791 = vld [vmem:[#allocation5 + $0x1b0] sm:$0xff]
    %v792 = vld [vmem:[#allocation5 + $0x1b8] sm:$0xff]
    %v793 = vld [vmem:[#allocation5 + $0x1c0] sm:$0xff]
    %v794 = vld [vmem:[#allocation5 + $0x1c8] sm:$0xff]
    %v795 = vld [vmem:[#allocation5 + $0x1d0] sm:$0xff]
    %v796 = vld [vmem:[#allocation5 + $0x1d8] sm:$0xff]
    %v797 = vld [vmem:[#allocation5 + $0x1e0] sm:$0xff]
    %v798 = vld [vmem:[#allocation5 + $0x1e8] sm:$0xff]
    %v799 = vld [vmem:[#allocation5 + $0x1f0] sm:$0xff]
    %v800 = vld [vmem:[#allocation5 + $0x1f8] sm:$0xff]
    %v801 = vld [vmem:[#allocation5 + $0x200] sm:$0xff]
    %v802 = vld [vmem:[#allocation5 + $0x208] sm:$0xff]
    %v803 = vld [vmem:[#allocation5 + $0x210] sm:$0xff]
    %v804 = vld [vmem:[#allocation5 + $0x218] sm:$0xff]
    %v805 = vld [vmem:[#allocation5 + $0x220] sm:$0xff]
    %v806 = vld [vmem:[#allocation5 + $0x228] sm:$0xff]
    %v807 = vld [vmem:[#allocation5 + $0x230] sm:$0xff]
    %v808 = vld [vmem:[#allocation5 + $0x238] sm:$0xff]
    %v809 = vld [vmem:[#allocation5 + $0x240] sm:$0xff]
    %v810 = vld [vmem:[#allocation5 + $0x248] sm:$0xff]
    %v811 = vld [vmem:[#allocation5 + $0x250] sm:$0xff]
    %v812 = vld [vmem:[#allocation5 + $0x258] sm:$0xff]
    %v813 = vld [vmem:[#allocation5 + $0x260] sm:$0xff]
    %v814 = vld [vmem:[#allocation5 + $0x268] sm:$0xff]
    %v815 = vld [vmem:[#allocation5 + $0x270] sm:$0xff]
    %v816 = vld [vmem:[#allocation5 + $0x278] sm:$0xff]
    %v817 = vld [vmem:[#allocation5 + $0x280] sm:$0xff]
    %v818 = vld [vmem:[#allocation5 + $0x288] sm:$0xff]
    %v819 = vld [vmem:[#allocation5 + $0x290] sm:$0xff]
    %v820 = vld [vmem:[#allocation5 + $0x298] sm:$0xff]
    %v821 = vld [vmem:[#allocation5 + $0x2a0] sm:$0xff]
    %v822 = vld [vmem:[#allocation5 + $0x2a8] sm:$0xff]
    %v823 = vld [vmem:[#allocation5 + $0x2b0] sm:$0xff]
    %v824 = vld [vmem:[#allocation5 + $0x2b8] sm:$0xff]
    %v825 = vld [vmem:[#allocation5 + $0x2c0] sm:$0xff]
    %v826 = vld [vmem:[#allocation5 + $0x2c8] sm:$0xff]
    %v827 = vld [vmem:[#allocation5 + $0x2d0] sm:$0xff]
    %v828 = vld [vmem:[#allocation5 + $0x2d8] sm:$0xff]
    %v829 = vld [vmem:[#allocation5 + $0x2e0] sm:$0xff]
    %v830 = vld [vmem:[#allocation5 + $0x2e8] sm:$0xff]
    %v831 = vld [vmem:[#allocation5 + $0x2f0] sm:$0xff]
    %v832 = vld [vmem:[#allocation5 + $0x2f8] sm:$0xff]
    %v833 = vld [vmem:[#allocation5 + $0x300] sm:$0xff]
    %v834 = vld [vmem:[#allocation5 + $0x308] sm:$0xff]
    %v835 = vld [vmem:[#allocation5 + $0x310] sm:$0xff]
    %v836 = vld [vmem:[#allocation5 + $0x318] sm:$0xff]
    %v837 = vld [vmem:[#allocation5 + $0x320] sm:$0xff]
    %v838 = vld [vmem:[#allocation5 + $0x328] sm:$0xff]
    %v839 = vld [vmem:[#allocation5 + $0x330] sm:$0xff]
    %v840 = vld [vmem:[#allocation5 + $0x338] sm:$0xff]
    %v841 = vld [vmem:[#allocation5 + $0x340] sm:$0xff]
    %v842 = vld [vmem:[#allocation5 + $0x348] sm:$0xff]
    %v843 = vld [vmem:[#allocation5 + $0x350] sm:$0xff]
    %v844 = vld [vmem:[#allocation5 + $0x358] sm:$0xff]
    %v845 = vld [vmem:[#allocation5 + $0x360] sm:$0xff]
    %v846 = vld [vmem:[#allocation5 + $0x368] sm:$0xff]
    %v847 = vld [vmem:[#allocation5 + $0x370] sm:$0xff]
    %v848 = vld [vmem:[#allocation5 + $0x378] sm:$0xff]
    %v849 = vld [vmem:[#allocation5 + $0x380] sm:$0xff]
    %v850 = vld [vmem:[#allocation5 + $0x388] sm:$0xff]
    %v851 = vld [vmem:[#allocation5 + $0x390] sm:$0xff]
    %v852 = vld [vmem:[#allocation5 + $0x398] sm:$0xff]
    %v853 = vld [vmem:[#allocation5 + $0x3a0] sm:$0xff]
    %v854 = vld [vmem:[#allocation5 + $0x3a8] sm:$0xff]
    %v855 = vld [vmem:[#allocation5 + $0x3b0] sm:$0xff]
    %v856 = vld [vmem:[#allocation5 + $0x3b8] sm:$0xff]
    %v857 = vld [vmem:[#allocation5 + $0x3c0] sm:$0xff]
    %v858 = vld [vmem:[#allocation5 + $0x3c8] sm:$0xff]
    %v859 = vld [vmem:[#allocation5 + $0x3d0] sm:$0xff]
    %v860 = vld [vmem:[#allocation5 + $0x3d8] sm:$0xff]
    %v861 = vld [vmem:[#allocation5 + $0x3e0] sm:$0xff]
    %v862 = vld [vmem:[#allocation5 + $0x3e8] sm:$0xff]
    %v863 = vld [vmem:[#allocation5 + $0x3f0] sm:$0xff]
    %v864 = vld [vmem:[#allocation5 + $0x3f8] sm:$0xff]
    %v865 = vld [vmem:[#allocation5 + $0x400] sm:$0xff]
    %v866 = vld [vmem:[#allocation5 + $0x408] sm:$0xff]
    %v867 = vld [vmem:[#allocation5 + $0x410] sm:$0xff]
    %v868 = vld [vmem:[#allocation5 + $0x418] sm:$0xff]
    %v869 = vld [vmem:[#allocation5 + $0x420] sm:$0xff]
    %v870 = vld [vmem:[#allocation5 + $0x428] sm:$0xff]
    %v871 = vld [vmem:[#allocation5 + $0x430] sm:$0xff]
    %v872 = vld [vmem:[#allocation5 + $0x438] sm:$0xff]
    %v873 = vld [vmem:[#allocation5 + $0x440] sm:$0xff]
    %v874 = vld [vmem:[#allocation5 + $0x448] sm:$0xff]
    %v875 = vld [vmem:[#allocation5 + $0x450] sm:$0xff]
    %v876 = vld [vmem:[#allocation5 + $0x458] sm:$0xff]
    %v877 = vld [vmem:[#allocation5 + $0x460] sm:$0xff]
    %v878 = vld [vmem:[#allocation5 + $0x468] sm:$0xff]
    %v879 = vld [vmem:[#allocation5 + $0x470] sm:$0xff]
    %v880 = vld [vmem:[#allocation5 + $0x478] sm:$0xff]
    %v881 = vld [vmem:[#allocation5 + $0x480] sm:$0xff]
    %v882 = vld [vmem:[#allocation5 + $0x488] sm:$0xff]
    %v883 = vld [vmem:[#allocation5 + $0x490] sm:$0xff]
    %v884 = vld [vmem:[#allocation5 + $0x498] sm:$0xff]
    %v885 = vld [vmem:[#allocation5 + $0x4a0] sm:$0xff]
    %v886 = vld [vmem:[#allocation5 + $0x4a8] sm:$0xff]
    %v887 = vld [vmem:[#allocation5 + $0x4b0] sm:$0xff]
    %v888 = vld [vmem:[#allocation5 + $0x4b8] sm:$0xff]
    %v889 = vld [vmem:[#allocation5 + $0x4c0] sm:$0xff]
    %v890 = vld [vmem:[#allocation5 + $0x4c8] sm:$0xff]
    %v891 = vld [vmem:[#allocation5 + $0x4d0] sm:$0xff]
    %v892 = vld [vmem:[#allocation5 + $0x4d8] sm:$0xff]
    %v893 = vld [vmem:[#allocation5 + $0x4e0] sm:$0xff]
    %v894 = vld [vmem:[#allocation5 + $0x4e8] sm:$0xff]
    %v895 = vld [vmem:[#allocation5 + $0x4f0] sm:$0xff]
    %v896 = vld [vmem:[#allocation5 + $0x4f8] sm:$0xff]
    %v897 = vld [vmem:[#allocation5 + $0x500] sm:$0xff]
    %v898 = vld [vmem:[#allocation5 + $0x508] sm:$0xff]
    %v899 = vld [vmem:[#allocation5 + $0x510] sm:$0xff]
    %v900 = vld [vmem:[#allocation5 + $0x518] sm:$0xff]
    %v901 = vld [vmem:[#allocation5 + $0x520] sm:$0xff]
    %v902 = vld [vmem:[#allocation5 + $0x528] sm:$0xff]
    %v903 = vld [vmem:[#allocation5 + $0x530] sm:$0xff]
    %v904 = vld [vmem:[#allocation5 + $0x538] sm:$0xff]
    %v905 = vld [vmem:[#allocation5 + $0x540] sm:$0xff]
    %v906 = vld [vmem:[#allocation5 + $0x548] sm:$0xff]
    %v907 = vld [vmem:[#allocation5 + $0x550] sm:$0xff]
    %v908 = vld [vmem:[#allocation5 + $0x558] sm:$0xff]
    %v909 = vld [vmem:[#allocation5 + $0x560] sm:$0xff]
    %v910 = vld [vmem:[#allocation5 + $0x568] sm:$0xff]
    %v911 = vld [vmem:[#allocation5 + $0x570] sm:$0xff]
    %v912 = vld [vmem:[#allocation5 + $0x578] sm:$0xff]
    %v913 = vld [vmem:[#allocation5 + $0x580] sm:$0xff]
    %v914 = vld [vmem:[#allocation5 + $0x588] sm:$0xff]
    %v915 = vld [vmem:[#allocation5 + $0x590] sm:$0xff]
    %v916 = vld [vmem:[#allocation5 + $0x598] sm:$0xff]
    %v917 = vld [vmem:[#allocation5 + $0x5a0] sm:$0xff]
    %v918 = vld [vmem:[#allocation5 + $0x5a8] sm:$0xff]
    %v919 = vld [vmem:[#allocation5 + $0x5b0] sm:$0xff]
    %v920 = vld [vmem:[#allocation5 + $0x5b8] sm:$0xff]
    %v921 = vld [vmem:[#allocation5 + $0x5c0] sm:$0xff]
    %v922 = vld [vmem:[#allocation5 + $0x5c8] sm:$0xff]
    %v923 = vld [vmem:[#allocation5 + $0x5d0] sm:$0xff]
    %v924 = vld [vmem:[#allocation5 + $0x5d8] sm:$0xff]
    %v925 = vld [vmem:[#allocation5 + $0x5e0] sm:$0xff]
    %v926 = vld [vmem:[#allocation5 + $0x5e8] sm:$0xff]
    %v927 = vld [vmem:[#allocation5 + $0x5f0] sm:$0xff]
    %v928 = vld [vmem:[#allocation5 + $0x5f8] sm:$0xff]
    %v929 = vld [vmem:[#allocation5 + $0x600] sm:$0xff]
    %v930 = vld [vmem:[#allocation5 + $0x608] sm:$0xff]
    %v931 = vld [vmem:[#allocation5 + $0x610] sm:$0xff]
    %v932 = vld [vmem:[#allocation5 + $0x618] sm:$0xff]
    %v933 = vld [vmem:[#allocation5 + $0x620] sm:$0xff]
    %v934 = vld [vmem:[#allocation5 + $0x628] sm:$0xff]
    %v935 = vld [vmem:[#allocation5 + $0x630] sm:$0xff]
    %v936 = vld [vmem:[#allocation5 + $0x638] sm:$0xff]
    %v937 = vld [vmem:[#allocation5 + $0x640] sm:$0xff]
    %v938 = vld [vmem:[#allocation5 + $0x648] sm:$0xff]
    %v939 = vld [vmem:[#allocation5 + $0x650] sm:$0xff]
    %v940 = vld [vmem:[#allocation5 + $0x658] sm:$0xff]
    %v941 = vld [vmem:[#allocation5 + $0x660] sm:$0xff]
    %v942 = vld [vmem:[#allocation5 + $0x668] sm:$0xff]
    %v943 = vld [vmem:[#allocation5 + $0x670] sm:$0xff]
    %v944 = vld [vmem:[#allocation5 + $0x678] sm:$0xff]
    %v945 = vld [vmem:[#allocation5 + $0x680] sm:$0xff]
    %v946 = vld [vmem:[#allocation5 + $0x688] sm:$0xff]
    %v947 = vld [vmem:[#allocation5 + $0x690] sm:$0xff]
    %v948 = vld [vmem:[#allocation5 + $0x698] sm:$0xff]
    %v949 = vld [vmem:[#allocation5 + $0x6a0] sm:$0xff]
    %v950 = vld [vmem:[#allocation5 + $0x6a8] sm:$0xff]
    %v951 = vld [vmem:[#allocation5 + $0x6b0] sm:$0xff]
    %v952 = vld [vmem:[#allocation5 + $0x6b8] sm:$0xff]
    %v953 = vld [vmem:[#allocation5 + $0x6c0] sm:$0xff]
    %v954 = vld [vmem:[#allocation5 + $0x6c8] sm:$0xff]
    %v955 = vld [vmem:[#allocation5 + $0x6d0] sm:$0xff]
    %v956 = vld [vmem:[#allocation5 + $0x6d8] sm:$0xff]
    %v957 = vld [vmem:[#allocation5 + $0x6e0] sm:$0xff]
    %v958 = vld [vmem:[#allocation5 + $0x6e8] sm:$0xff]
    %v959 = vld [vmem:[#allocation5 + $0x6f0] sm:$0xff]
    %v960 = vld [vmem:[#allocation5 + $0x6f8] sm:$0xff]
    %v961 = vld [vmem:[#allocation5 + $0x700] sm:$0xff]
    %v962 = vld [vmem:[#allocation5 + $0x708] sm:$0xff]
    %v963 = vld [vmem:[#allocation5 + $0x710] sm:$0xff]
    %v964 = vld [vmem:[#allocation5 + $0x718] sm:$0xff]
    %v965 = vld [vmem:[#allocation5 + $0x720] sm:$0xff]
    %v966 = vld [vmem:[#allocation5 + $0x728] sm:$0xff]
    %v967 = vld [vmem:[#allocation5 + $0x730] sm:$0xff]
    %v968 = vld [vmem:[#allocation5 + $0x738] sm:$0xff]
    %v969 = vld [vmem:[#allocation5 + $0x740] sm:$0xff]
    %v970 = vld [vmem:[#allocation5 + $0x748] sm:$0xff]
    %v971 = vld [vmem:[#allocation5 + $0x750] sm:$0xff]
    %v972 = vld [vmem:[#allocation5 + $0x758] sm:$0xff]
    %v973 = vld [vmem:[#allocation5 + $0x760] sm:$0xff]
    %v974 = vld [vmem:[#allocation5 + $0x768] sm:$0xff]
    %v975 = vld [vmem:[#allocation5 + $0x770] sm:$0xff]
    %v976 = vld [vmem:[#allocation5 + $0x778] sm:$0xff]
    %v977 = vld [vmem:[#allocation5 + $0x780] sm:$0xff]
    %v978 = vld [vmem:[#allocation5 + $0x788] sm:$0xff]
    %v979 = vld [vmem:[#allocation5 + $0x790] sm:$0xff]
    %v980 = vld [vmem:[#allocation5 + $0x798] sm:$0xff]
    %v981 = vld [vmem:[#allocation5 + $0x7a0] sm:$0xff]
    %v982 = vld [vmem:[#allocation5 + $0x7a8] sm:$0xff]
    %v983 = vld [vmem:[#allocation5 + $0x7b0] sm:$0xff]
    %v984 = vld [vmem:[#allocation5 + $0x7b8] sm:$0xff]
    %v985 = vld [vmem:[#allocation5 + $0x7c0] sm:$0xff]
    %v986 = vld [vmem:[#allocation5 + $0x7c8] sm:$0xff]
    %v987 = vld [vmem:[#allocation5 + $0x7d0] sm:$0xff]
    %v988 = vld [vmem:[#allocation5 + $0x7d8] sm:$0xff]
    %v989 = vld [vmem:[#allocation5 + $0x7e0] sm:$0xff]
    %v990 = vld [vmem:[#allocation5 + $0x7e8] sm:$0xff]
    %v991 = vld [vmem:[#allocation5 + $0x7f0] sm:$0xff]
    %v992 = vld [vmem:[#allocation5 + $0x7f8] sm:$0xff]
    %v993 = vld [vmem:[%s6] sm:$0xf]
    %v995 = vlaneseq
    %v996 = vshrl.u32 %v995, 7
    %v997 = vsub.s32 0, %v996
    %v998 = vrot.slane %v993, %v997
    %v999 = vlaneseq
    %v1000 = vshrl.u32 %v999, 7
    %v1001 = vsub.s32 1, %v1000
    %v1002 = vrot.slane %v993, %v1001
    %v1003 = vlaneseq
    %v1004 = vshrl.u32 %v1003, 7
    %v1005 = vsub.s32 2, %v1004
    %v1006 = vrot.slane %v993, %v1005
    %v1007 = vlaneseq
    %v1008 = vshrl.u32 %v1007, 7
    %v1009 = vsub.s32 3, %v1008
    %v1010 = vrot.slane %v993, %v1009
    %1015 = vmatprep.subr.mxu0 %v798
    %1016 = vmatpush1.msra.mxu0 %v797
    %1017 = vmatprep.subr.mxu0 %v794
    %1018 = vmatpush1.msra.mxu0 %v793
    %1019 = vmatprep.subr.mxu0 %v790
    %1020 = vmatpush1.msra.mxu0 %v789
    %1021 = vmatprep.subr.mxu0 %v786
    %1022 = vmatpush1.msra.mxu0 %v785
    %1023 = vmatprep.subr.mxu0 %v782
    %1024 = vmatpush1.msra.mxu0 %v781
    %1025 = vmatprep.subr.mxu0 %v778
    %1026 = vmatpush1.msra.mxu0 %v777
    %1027 = vmatprep.subr.mxu0 %v774
    %1028 = vmatpush1.msra.mxu0 %v773
    %1029 = vmatprep.subr.mxu0 %v770
    %1030 = vmatpush1.msra.mxu0 %v769
    %1031 = vmatprep.subr.mxu0 %v766
    %1032 = vmatpush1.msra.mxu0 %v765
    %1033 = vmatprep.subr.mxu0 %v762
    %1034 = vmatpush1.msra.mxu0 %v761
    %1035 = vmatprep.subr.mxu0 %v758
    %1036 = vmatpush1.msra.mxu0 %v757
    %1037 = vmatprep.subr.mxu0 %v754
    %1038 = vmatpush1.msra.mxu0 %v753
    %1039 = vmatprep.subr.mxu0 %v750
    %1040 = vmatpush1.msra.mxu0 %v749
    %1041 = vmatprep.subr.mxu0 %v746
    %1042 = vmatpush1.msra.mxu0 %v745
    %1043 = vmatprep.subr.mxu0 %v742
    %1044 = vmatpush1.msra.mxu0 %v741
    %1045 = vmatprep.subr.mxu0 %v738
    %1046 = vmatpush1.msra.mxu0 %v737
    %1047 = vmatprep.subr.mxu0 %v862
    %1048 = vmatpush2.msra.mxu0 %v861
    %1049 = vmatprep.subr.mxu0 %v858
    %1050 = vmatpush2.msra.mxu0 %v857
    %1051 = vmatprep.subr.mxu0 %v854
    %1052 = vmatpush2.msra.mxu0 %v853
    %1053 = vmatprep.subr.mxu0 %v850
    %1054 = vmatpush2.msra.mxu0 %v849
    %1055 = vmatprep.subr.mxu0 %v846
    %1056 = vmatpush2.msra.mxu0 %v845
    %1057 = vmatprep.subr.mxu0 %v842
    %1058 = vmatpush2.msra.mxu0 %v841
    %1059 = vmatprep.subr.mxu0 %v838
    %1060 = vmatpush2.msra.mxu0 %v837
    %1061 = vmatprep.subr.mxu0 %v834
    %1062 = vmatpush2.msra.mxu0 %v833
    %1063 = vmatprep.subr.mxu0 %v830
    %1064 = vmatpush2.msra.mxu0 %v829
    %1065 = vmatprep.subr.mxu0 %v826
    %1066 = vmatpush2.msra.mxu0 %v825
    %1067 = vmatprep.subr.mxu0 %v822
    %1068 = vmatpush2.msra.mxu0 %v821
    %1069 = vmatprep.subr.mxu0 %v818
    %1070 = vmatpush2.msra.mxu0 %v817
    %1071 = vmatprep.subr.mxu0 %v814
    %1072 = vmatpush2.msra.mxu0 %v813
    %1073 = vmatprep.subr.mxu0 %v810
    %1074 = vmatpush2.msra.mxu0 %v809
    %1075 = vmatprep.subr.mxu0 %v806
    %1076 = vmatpush2.msra.mxu0 %v805
    %1077 = vmatprep.subr.mxu0 %v802
    %1078 = vmatpush2.msra.mxu0 %v801
    %1079 = vmatprep.mubr.f32.mxu0 %v734
    %1080 = vmatmul.mubr.f32.gmra.mxu0 %v733
    %v1081 = vpop.f32.mrf.mxu0
    %v1082 = vadd.f32 %v998, %v1081
    %v1083 = vpop.f32.mrf.mxu0
    %v1084 = vadd.f32 %v1002, %v1083
    %1085 = vdwg.mxu0
    %1086 = vmatprep.subr.mxu0 %v926
    %1087 = vmatpush1.msra.mxu0 %v925
    %1088 = vmatprep.subr.mxu0 %v922
    %1089 = vmatpush1.msra.mxu0 %v921
    %1090 = vmatprep.subr.mxu0 %v918
    %1091 = vmatpush1.msra.mxu0 %v917
    %1092 = vmatprep.subr.mxu0 %v914
    %1093 = vmatpush1.msra.mxu0 %v913
    %1094 = vmatprep.subr.mxu0 %v910
    %1095 = vmatpush1.msra.mxu0 %v909
    %1096 = vmatprep.subr.mxu0 %v906
    %1097 = vmatpush1.msra.mxu0 %v905
    %1098 = vmatprep.subr.mxu0 %v902
    %1099 = vmatpush1.msra.mxu0 %v901
    %1100 = vmatprep.subr.mxu0 %v898
    %1101 = vmatpush1.msra.mxu0 %v897
    %1102 = vmatprep.subr.mxu0 %v894
    %1103 = vmatpush1.msra.mxu0 %v893
    %1104 = vmatprep.subr.mxu0 %v890
    %1105 = vmatpush1.msra.mxu0 %v889
    %1106 = vmatprep.subr.mxu0 %v886
    %1107 = vmatpush1.msra.mxu0 %v885
    %1108 = vmatprep.subr.mxu0 %v882
    %1109 = vmatpush1.msra.mxu0 %v881
    %1110 = vmatprep.subr.mxu0 %v878
    %1111 = vmatpush1.msra.mxu0 %v877
    %1112 = vmatprep.subr.mxu0 %v874
    %1113 = vmatpush1.msra.mxu0 %v873
    %1114 = vmatprep.subr.mxu0 %v870
    %1115 = vmatpush1.msra.mxu0 %v869
    %1116 = vmatprep.subr.mxu0 %v866
    %1117 = vmatpush1.msra.mxu0 %v865
    %1118 = vmatprep.subr.mxu0 %v990
    %1119 = vmatpush2.msra.mxu0 %v989
    %1120 = vmatprep.subr.mxu0 %v986
    %1121 = vmatpush2.msra.mxu0 %v985
    %1122 = vmatprep.subr.mxu0 %v982
    %1123 = vmatpush2.msra.mxu0 %v981
    %1124 = vmatprep.subr.mxu0 %v978
    %1125 = vmatpush2.msra.mxu0 %v977
    %1126 = vmatprep.subr.mxu0 %v974
    %1127 = vmatpush2.msra.mxu0 %v973
    %1128 = vmatprep.subr.mxu0 %v970
    %1129 = vmatpush2.msra.mxu0 %v969
    %1130 = vmatprep.subr.mxu0 %v966
    %1131 = vmatpush2.msra.mxu0 %v965
    %1132 = vmatprep.subr.mxu0 %v962
    %1133 = vmatpush2.msra.mxu0 %v961
    %1134 = vmatprep.subr.mxu0 %v958
    %1135 = vmatpush2.msra.mxu0 %v957
    %1136 = vmatprep.subr.mxu0 %v954
    %1137 = vmatpush2.msra.mxu0 %v953
    %1138 = vmatprep.subr.mxu0 %v950
    %1139 = vmatpush2.msra.mxu0 %v949
    %1140 = vmatprep.subr.mxu0 %v946
    %1141 = vmatpush2.msra.mxu0 %v945
    %1142 = vmatprep.subr.mxu0 %v942
    %1143 = vmatpush2.msra.mxu0 %v941
    %1144 = vmatprep.subr.mxu0 %v938
    %1145 = vmatpush2.msra.mxu0 %v937
    %1146 = vmatprep.subr.mxu0 %v934
    %1147 = vmatpush2.msra.mxu0 %v933
    %1148 = vmatprep.subr.mxu0 %v930
    %1149 = vmatpush2.msra.mxu0 %v929
    %1150 = vmatprep.mubr.f32.mxu0 %v736
    %1151 = vmatmul.mubr.f32.gmra.mxu0 %v735
    %v1152 = vpop.f32.mrf.mxu0
    %v1153 = vadd.f32 %v1082, %v1152
    %v1154 = vpop.f32.mrf.mxu0
    %v1155 = vadd.f32 %v1084, %v1154
    %1156 = vdwg.mxu0
    %1157 = vmatprep.subr.mxu0 %v800
    %1158 = vmatpush1.msra.mxu0 %v799
    %1159 = vmatprep.subr.mxu0 %v796
    %1160 = vmatpush1.msra.mxu0 %v795
    %1161 = vmatprep.subr.mxu0 %v792
    %1162 = vmatpush1.msra.mxu0 %v791
    %1163 = vmatprep.subr.mxu0 %v788
    %1164 = vmatpush1.msra.mxu0 %v787
    %1165 = vmatprep.subr.mxu0 %v784
    %1166 = vmatpush1.msra.mxu0 %v783
    %1167 = vmatprep.subr.mxu0 %v780
    %1168 = vmatpush1.msra.mxu0 %v779
    %1169 = vmatprep.subr.mxu0 %v776
    %1170 = vmatpush1.msra.mxu0 %v775
    %1171 = vmatprep.subr.mxu0 %v772
    %1172 = vmatpush1.msra.mxu0 %v771
    %1173 = vmatprep.subr.mxu0 %v768
    %1174 = vmatpush1.msra.mxu0 %v767
    %1175 = vmatprep.subr.mxu0 %v764
    %1176 = vmatpush1.msra.mxu0 %v763
    %1177 = vmatprep.subr.mxu0 %v760
    %1178 = vmatpush1.msra.mxu0 %v759
    %1179 = vmatprep.subr.mxu0 %v756
    %1180 = vmatpush1.msra.mxu0 %v755
    %1181 = vmatprep.subr.mxu0 %v752
    %1182 = vmatpush1.msra.mxu0 %v751
    %1183 = vmatprep.subr.mxu0 %v748
    %1184 = vmatpush1.msra.mxu0 %v747
    %1185 = vmatprep.subr.mxu0 %v744
    %1186 = vmatpush1.msra.mxu0 %v743
    %1187 = vmatprep.subr.mxu0 %v740
    %1188 = vmatpush1.msra.mxu0 %v739
    %1189 = vmatprep.subr.mxu0 %v864
    %1190 = vmatpush2.msra.mxu0 %v863
    %1191 = vmatprep.subr.mxu0 %v860
    %1192 = vmatpush2.msra.mxu0 %v859
    %1193 = vmatprep.subr.mxu0 %v856
    %1194 = vmatpush2.msra.mxu0 %v855
    %1195 = vmatprep.subr.mxu0 %v852
    %1196 = vmatpush2.msra.mxu0 %v851
    %1197 = vmatprep.subr.mxu0 %v848
    %1198 = vmatpush2.msra.mxu0 %v847
    %1199 = vmatprep.subr.mxu0 %v844
    %1200 = vmatpush2.msra.mxu0 %v843
    %1201 = vmatprep.subr.mxu0 %v840
    %1202 = vmatpush2.msra.mxu0 %v839
    %1203 = vmatprep.subr.mxu0 %v836
    %1204 = vmatpush2.msra.mxu0 %v835
    %1205 = vmatprep.subr.mxu0 %v832
    %1206 = vmatpush2.msra.mxu0 %v831
    %1207 = vmatprep.subr.mxu0 %v828
    %1208 = vmatpush2.msra.mxu0 %v827
    %1209 = vmatprep.subr.mxu0 %v824
    %1210 = vmatpush2.msra.mxu0 %v823
    %1211 = vmatprep.subr.mxu0 %v820
    %1212 = vmatpush2.msra.mxu0 %v819
    %1213 = vmatprep.subr.mxu0 %v816
    %1214 = vmatpush2.msra.mxu0 %v815
    %1215 = vmatprep.subr.mxu0 %v812
    %1216 = vmatpush2.msra.mxu0 %v811
    %1217 = vmatprep.subr.mxu0 %v808
    %1218 = vmatpush2.msra.mxu0 %v807
    %1219 = vmatprep.subr.mxu0 %v804
    %1220 = vmatpush2.msra.mxu0 %v803
    %1221 = vmatprep.mubr.f32.mxu0 %v734
    %1222 = vmatmul.mubr.f32.gmra.mxu0 %v733
    %v1223 = vpop.f32.mrf.mxu0
    %v1224 = vadd.f32 %v1006, %v1223
    %v1225 = vpop.f32.mrf.mxu0
    %v1226 = vadd.f32 %v1010, %v1225
    %1227 = vdwg.mxu0
    %1228 = vmatprep.subr.mxu0 %v928
    %1229 = vmatpush1.msra.mxu0 %v927
    %1230 = vmatprep.subr.mxu0 %v924
    %1231 = vmatpush1.msra.mxu0 %v923
    %1232 = vmatprep.subr.mxu0 %v920
    %1233 = vmatpush1.msra.mxu0 %v919
    %1234 = vmatprep.subr.mxu0 %v916
    %1235 = vmatpush1.msra.mxu0 %v915
    %1236 = vmatprep.subr.mxu0 %v912
    %1237 = vmatpush1.msra.mxu0 %v911
    %1238 = vmatprep.subr.mxu0 %v908
    %1239 = vmatpush1.msra.mxu0 %v907
    %1240 = vmatprep.subr.mxu0 %v904
    %1241 = vmatpush1.msra.mxu0 %v903
    %1242 = vmatprep.subr.mxu0 %v900
    %1243 = vmatpush1.msra.mxu0 %v899
    %1244 = vmatprep.subr.mxu0 %v896
    %1245 = vmatpush1.msra.mxu0 %v895
    %1246 = vmatprep.subr.mxu0 %v892
    %1247 = vmatpush1.msra.mxu0 %v891
    %1248 = vmatprep.subr.mxu0 %v888
    %1249 = vmatpush1.msra.mxu0 %v887
    %1250 = vmatprep.subr.mxu0 %v884
    %1251 = vmatpush1.msra.mxu0 %v883
    %1252 = vmatprep.subr.mxu0 %v880
    %1253 = vmatpush1.msra.mxu0 %v879
    %1254 = vmatprep.subr.mxu0 %v876
    %1255 = vmatpush1.msra.mxu0 %v875
    %1256 = vmatprep.subr.mxu0 %v872
    %1257 = vmatpush1.msra.mxu0 %v871
    %1258 = vmatprep.subr.mxu0 %v868
    %1259 = vmatpush1.msra.mxu0 %v867
    %1260 = vmatprep.subr.mxu0 %v992
    %1261 = vmatpush2.msra.mxu0 %v991
    %1262 = vmatprep.subr.mxu0 %v988
    %1263 = vmatpush2.msra.mxu0 %v987
    %1264 = vmatprep.subr.mxu0 %v984
    %1265 = vmatpush2.msra.mxu0 %v983
    %1266 = vmatprep.subr.mxu0 %v980
    %1267 = vmatpush2.msra.mxu0 %v979
    %1268 = vmatprep.subr.mxu0 %v976
    %1269 = vmatpush2.msra.mxu0 %v975
    %1270 = vmatprep.subr.mxu0 %v972
    %1271 = vmatpush2.msra.mxu0 %v971
    %1272 = vmatprep.subr.mxu0 %v968
    %1273 = vmatpush2.msra.mxu0 %v967
    %1274 = vmatprep.subr.mxu0 %v964
    %1275 = vmatpush2.msra.mxu0 %v963
    %1276 = vmatprep.subr.mxu0 %v960
    %1277 = vmatpush2.msra.mxu0 %v959
    %1278 = vmatprep.subr.mxu0 %v956
    %1279 = vmatpush2.msra.mxu0 %v955
    %1280 = vmatprep.subr.mxu0 %v952
    %1281 = vmatpush2.msra.mxu0 %v951
    %1282 = vmatprep.subr.mxu0 %v948
    %1283 = vmatpush2.msra.mxu0 %v947
    %1284 = vmatprep.subr.mxu0 %v944
    %1285 = vmatpush2.msra.mxu0 %v943
    %1286 = vmatprep.subr.mxu0 %v940
    %1287 = vmatpush2.msra.mxu0 %v939
    %1288 = vmatprep.subr.mxu0 %v936
    %1289 = vmatpush2.msra.mxu0 %v935
    %1290 = vmatprep.subr.mxu0 %v932
    %1291 = vmatpush2.msra.mxu0 %v931
    %1292 = vmatprep.mubr.f32.mxu0 %v736
    %1293 = vmatmul.mubr.f32.gmra.mxu0 %v735
    %v1294 = vpop.f32.mrf.mxu0
    %v1295 = vadd.f32 %v1224, %v1294
    %v1296 = vpop.f32.mrf.mxu0
    %v1297 = vadd.f32 %v1226, %v1296
    %1298 = vdwg.mxu0
    %v1299 = vmax.f32 %v1153, 0.0
    %v1300 = vmax.f32 %v1155, 0.0
    %v1301 = vmax.f32 %v1295, 0.0
    %v1302 = vmax.f32 %v1297, 0.0
    %v1303 = vld [vmem:[#allocation7] sm:$0xff]
    %v1304 = vld [vmem:[#allocation7 + $0x8] sm:$0xff]
    %v1305 = vld [vmem:[#allocation7 + $0x10] sm:$0xff]
    %v1306 = vld [vmem:[#allocation7 + $0x18] sm:$0xff]
    %v1307 = vld [vmem:[#allocation7 + $0x20] sm:$0xff]
    %v1308 = vld [vmem:[#allocation7 + $0x28] sm:$0xff]
    %v1309 = vld [vmem:[#allocation7 + $0x30] sm:$0xff]
    %v1310 = vld [vmem:[#allocation7 + $0x38] sm:$0xff]
    %v1311 = vld [vmem:[#allocation7 + $0x40] sm:$0xff]
    %v1312 = vld [vmem:[#allocation7 + $0x48] sm:$0xff]
    %v1313 = vld [vmem:[#allocation7 + $0x50] sm:$0xff]
    %v1314 = vld [vmem:[#allocation7 + $0x58] sm:$0xff]
    %v1315 = vld [vmem:[#allocation7 + $0x60] sm:$0xff]
    %v1316 = vld [vmem:[#allocation7 + $0x68] sm:$0xff]
    %v1317 = vld [vmem:[#allocation7 + $0x70] sm:$0xff]
    %v1318 = vld [vmem:[#allocation7 + $0x78] sm:$0xff]
    %v1319 = vld [vmem:[#allocation7 + $0x80] sm:$0xff]
    %v1320 = vld [vmem:[#allocation7 + $0x88] sm:$0xff]
    %v1321 = vld [vmem:[#allocation7 + $0x90] sm:$0xff]
    %v1322 = vld [vmem:[#allocation7 + $0x98] sm:$0xff]
    %v1323 = vld [vmem:[#allocation7 + $0xa0] sm:$0xff]
    %v1324 = vld [vmem:[#allocation7 + $0xa8] sm:$0xff]
    %v1325 = vld [vmem:[#allocation7 + $0xb0] sm:$0xff]
    %v1326 = vld [vmem:[#allocation7 + $0xb8] sm:$0xff]
    %v1327 = vld [vmem:[#allocation7 + $0xc0] sm:$0xff]
    %v1328 = vld [vmem:[#allocation7 + $0xc8] sm:$0xff]
    %v1329 = vld [vmem:[#allocation7 + $0xd0] sm:$0xff]
    %v1330 = vld [vmem:[#allocation7 + $0xd8] sm:$0xff]
    %v1331 = vld [vmem:[#allocation7 + $0xe0] sm:$0xff]
    %v1332 = vld [vmem:[#allocation7 + $0xe8] sm:$0xff]
    %v1333 = vld [vmem:[#allocation7 + $0xf0] sm:$0xff]
    %v1334 = vld [vmem:[#allocation7 + $0xf8] sm:$0xff]
    %v1335 = vld [vmem:[#allocation7 + $0x100] sm:$0xff]
    %v1336 = vld [vmem:[#allocation7 + $0x108] sm:$0xff]
    %v1337 = vld [vmem:[#allocation7 + $0x110] sm:$0xff]
    %v1338 = vld [vmem:[#allocation7 + $0x118] sm:$0xff]
    %v1339 = vld [vmem:[#allocation7 + $0x120] sm:$0xff]
    %v1340 = vld [vmem:[#allocation7 + $0x128] sm:$0xff]
    %v1341 = vld [vmem:[#allocation7 + $0x130] sm:$0xff]
    %v1342 = vld [vmem:[#allocation7 + $0x138] sm:$0xff]
    %v1343 = vld [vmem:[#allocation7 + $0x140] sm:$0xff]
    %v1344 = vld [vmem:[#allocation7 + $0x148] sm:$0xff]
    %v1345 = vld [vmem:[#allocation7 + $0x150] sm:$0xff]
    %v1346 = vld [vmem:[#allocation7 + $0x158] sm:$0xff]
    %v1347 = vld [vmem:[#allocation7 + $0x160] sm:$0xff]
    %v1348 = vld [vmem:[#allocation7 + $0x168] sm:$0xff]
    %v1349 = vld [vmem:[#allocation7 + $0x170] sm:$0xff]
    %v1350 = vld [vmem:[#allocation7 + $0x178] sm:$0xff]
    %v1351 = vld [vmem:[#allocation7 + $0x180] sm:$0xff]
    %v1352 = vld [vmem:[#allocation7 + $0x188] sm:$0xff]
    %v1353 = vld [vmem:[#allocation7 + $0x190] sm:$0xff]
    %v1354 = vld [vmem:[#allocation7 + $0x198] sm:$0xff]
    %v1355 = vld [vmem:[#allocation7 + $0x1a0] sm:$0xff]
    %v1356 = vld [vmem:[#allocation7 + $0x1a8] sm:$0xff]
    %v1357 = vld [vmem:[#allocation7 + $0x1b0] sm:$0xff]
    %v1358 = vld [vmem:[#allocation7 + $0x1b8] sm:$0xff]
    %v1359 = vld [vmem:[#allocation7 + $0x1c0] sm:$0xff]
    %v1360 = vld [vmem:[#allocation7 + $0x1c8] sm:$0xff]
    %v1361 = vld [vmem:[#allocation7 + $0x1d0] sm:$0xff]
    %v1362 = vld [vmem:[#allocation7 + $0x1d8] sm:$0xff]
    %v1363 = vld [vmem:[#allocation7 + $0x1e0] sm:$0xff]
    %v1364 = vld [vmem:[#allocation7 + $0x1e8] sm:$0xff]
    %v1365 = vld [vmem:[#allocation7 + $0x1f0] sm:$0xff]
    %v1366 = vld [vmem:[#allocation7 + $0x1f8] sm:$0xff]
    %v1367 = vld [vmem:[%s8] sm:$0x1]
    %v1369 = vlaneseq
    %v1370 = vshrl.u32 %v1369, 7
    %v1371 = vsub.s32 0, %v1370
    %v1372 = vrot.slane %v1367, %v1371
    %1374 = vmatprep.subr.mxu0 0.0
    %1375 = vmatpush1.msra.mxu0 %v1318
    %1376 = vmatprep.subr.mxu0 0.0
    %1377 = vmatpush1.msra.mxu0 %v1317
    %1378 = vmatprep.subr.mxu0 0.0
    %1379 = vmatpush1.msra.mxu0 %v1316
    %1380 = vmatprep.subr.mxu0 0.0
    %1381 = vmatpush1.msra.mxu0 %v1315
    %1382 = vmatprep.subr.mxu0 0.0
    %1383 = vmatpush1.msra.mxu0 %v1314
    %1384 = vmatprep.subr.mxu0 0.0
    %1385 = vmatpush1.msra.mxu0 %v1313
    %1386 = vmatprep.subr.mxu0 0.0
    %1387 = vmatpush1.msra.mxu0 %v1312
    %1388 = vmatprep.subr.mxu0 0.0
    %1389 = vmatpush1.msra.mxu0 %v1311
    %1390 = vmatprep.subr.mxu0 0.0
    %1391 = vmatpush1.msra.mxu0 %v1310
    %1392 = vmatprep.subr.mxu0 0.0
    %1393 = vmatpush1.msra.mxu0 %v1309
    %1394 = vmatprep.subr.mxu0 0.0
    %1395 = vmatpush1.msra.mxu0 %v1308
    %1396 = vmatprep.subr.mxu0 0.0
    %1397 = vmatpush1.msra.mxu0 %v1307
    %1398 = vmatprep.subr.mxu0 0.0
    %1399 = vmatpush1.msra.mxu0 %v1306
    %1400 = vmatprep.subr.mxu0 0.0
    %1401 = vmatpush1.msra.mxu0 %v1305
    %1402 = vmatprep.subr.mxu0 0.0
    %1403 = vmatpush1.msra.mxu0 %v1304
    %1404 = vmatprep.subr.mxu0 0.0
    %1405 = vmatpush1.msra.mxu0 %v1303
    %1406 = vmatprep.subr.mxu0 0.0
    %1407 = vmatpush2.msra.mxu0 %v1334
    %1408 = vmatprep.subr.mxu0 0.0
    %1409 = vmatpush2.msra.mxu0 %v1333
    %1410 = vmatprep.subr.mxu0 0.0
    %1411 = vmatpush2.msra.mxu0 %v1332
    %1412 = vmatprep.subr.mxu0 0.0
    %1413 = vmatpush2.msra.mxu0 %v1331
    %1414 = vmatprep.subr.mxu0 0.0
    %1415 = vmatpush2.msra.mxu0 %v1330
    %1416 = vmatprep.subr.mxu0 0.0
    %1417 = vmatpush2.msra.mxu0 %v1329
    %1418 = vmatprep.subr.mxu0 0.0
    %1419 = vmatpush2.msra.mxu0 %v1328
    %1420 = vmatprep.subr.mxu0 0.0
    %1421 = vmatpush2.msra.mxu0 %v1327
    %1422 = vmatprep.subr.mxu0 0.0
    %1423 = vmatpush2.msra.mxu0 %v1326
    %1424 = vmatprep.subr.mxu0 0.0
    %1425 = vmatpush2.msra.mxu0 %v1325
    %1426 = vmatprep.subr.mxu0 0.0
    %1427 = vmatpush2.msra.mxu0 %v1324
    %1428 = vmatprep.subr.mxu0 0.0
    %1429 = vmatpush2.msra.mxu0 %v1323
    %1430 = vmatprep.subr.mxu0 0.0
    %1431 = vmatpush2.msra.mxu0 %v1322
    %1432 = vmatprep.subr.mxu0 0.0
    %1433 = vmatpush2.msra.mxu0 %v1321
    %1434 = vmatprep.subr.mxu0 0.0
    %1435 = vmatpush2.msra.mxu0 %v1320
    %1436 = vmatprep.subr.mxu0 0.0
    %1437 = vmatpush2.msra.mxu0 %v1319
    %1438 = vmatprep.mubr.f32.mxu0 %v1300
    %1439 = vmatmul.mubr.f32.gmra.mxu0 %v1299
    %v1440 = vpop.f32.mrf.mxu0
    %v1441 = vadd.f32 %v1372, %v1440
    %v1442 = vpop.f32.mrf.mxu0
    %1443 = vdwg.mxu0
    %1444 = vmatprep.subr.mxu0 0.0
    %1445 = vmatpush1.msra.mxu0 %v1350
    %1446 = vmatprep.subr.mxu0 0.0
    %1447 = vmatpush1.msra.mxu0 %v1349
    %1448 = vmatprep.subr.mxu0 0.0
    %1449 = vmatpush1.msra.mxu0 %v1348
    %1450 = vmatprep.subr.mxu0 0.0
    %1451 = vmatpush1.msra.mxu0 %v1347
    %1452 = vmatprep.subr.mxu0 0.0
    %1453 = vmatpush1.msra.mxu0 %v1346
    %1454 = vmatprep.subr.mxu0 0.0
    %1455 = vmatpush1.msra.mxu0 %v1345
    %1456 = vmatprep.subr.mxu0 0.0
    %1457 = vmatpush1.msra.mxu0 %v1344
    %1458 = vmatprep.subr.mxu0 0.0
    %1459 = vmatpush1.msra.mxu0 %v1343
    %1460 = vmatprep.subr.mxu0 0.0
    %1461 = vmatpush1.msra.mxu0 %v1342
    %1462 = vmatprep.subr.mxu0 0.0
    %1463 = vmatpush1.msra.mxu0 %v1341
    %1464 = vmatprep.subr.mxu0 0.0
    %1465 = vmatpush1.msra.mxu0 %v1340
    %1466 = vmatprep.subr.mxu0 0.0
    %1467 = vmatpush1.msra.mxu0 %v1339
    %1468 = vmatprep.subr.mxu0 0.0
    %1469 = vmatpush1.msra.mxu0 %v1338
    %1470 = vmatprep.subr.mxu0 0.0
    %1471 = vmatpush1.msra.mxu0 %v1337
    %1472 = vmatprep.subr.mxu0 0.0
    %1473 = vmatpush1.msra.mxu0 %v1336
    %1474 = vmatprep.subr.mxu0 0.0
    %1475 = vmatpush1.msra.mxu0 %v1335
    %1476 = vmatprep.subr.mxu0 0.0
    %1477 = vmatpush2.msra.mxu0 %v1366
    %1478 = vmatprep.subr.mxu0 0.0
    %1479 = vmatpush2.msra.mxu0 %v1365
    %1480 = vmatprep.subr.mxu0 0.0
    %1481 = vmatpush2.msra.mxu0 %v1364
    %1482 = vmatprep.subr.mxu0 0.0
    %1483 = vmatpush2.msra.mxu0 %v1363
    %1484 = vmatprep.subr.mxu0 0.0
    %1485 = vmatpush2.msra.mxu0 %v1362
    %1486 = vmatprep.subr.mxu0 0.0
    %1487 = vmatpush2.msra.mxu0 %v1361
    %1488 = vmatprep.subr.mxu0 0.0
    %1489 = vmatpush2.msra.mxu0 %v1360
    %1490 = vmatprep.subr.mxu0 0.0
    %1491 = vmatpush2.msra.mxu0 %v1359
    %1492 = vmatprep.subr.mxu0 0.0
    %1493 = vmatpush2.msra.mxu0 %v1358
    %1494 = vmatprep.subr.mxu0 0.0
    %1495 = vmatpush2.msra.mxu0 %v1357
    %1496 = vmatprep.subr.mxu0 0.0
    %1497 = vmatpush2.msra.mxu0 %v1356
    %1498 = vmatprep.subr.mxu0 0.0
    %1499 = vmatpush2.msra.mxu0 %v1355
    %1500 = vmatprep.subr.mxu0 0.0
    %1501 = vmatpush2.msra.mxu0 %v1354
    %1502 = vmatprep.subr.mxu0 0.0
    %1503 = vmatpush2.msra.mxu0 %v1353
    %1504 = vmatprep.subr.mxu0 0.0
    %1505 = vmatpush2.msra.mxu0 %v1352
    %1506 = vmatprep.subr.mxu0 0.0
    %1507 = vmatpush2.msra.mxu0 %v1351
    %1508 = vmatprep.mubr.f32.mxu0 %v1302
    %1509 = vmatmul.mubr.f32.gmra.mxu0 %v1301
    %v1510 = vpop.f32.mrf.mxu0
    %v1511 = vadd.f32 %v1441, %v1510
    %v1512 = vpop.f32.mrf.mxu0
    %1513 = vdwg.mxu0
    %1514 = vst [vmem:[#allocation8] sm:$0xff] %v1511
    // Predicated region
    $region50: #{tpu_custom_call.1} parent=1 // pred_check
      _
    $region51: #{tpu_custom_call.1} parent=1 // pred_check_branch
      %1516 = sbr.rel (0) target = $region53
    $region52: #{tpu_custom_call.1} parent=1 // pred_region
      %s1518 = ssub.s32 128, 128
      %1519 = vsyncadd [#allocation4], %s1518
      %s1521 = sshll.u32 [#allocation8], 4
      %s1522 = int_to_ptr.vmem [resolvable:$true] %s1521
      %1524 = dma.vmem_to_hbm [thread:$0]  %s1522, 128, %s9, [#allocation4]
    $region53: #{tpu_custom_call.1} parent=1 // pred_fallthru
      _
    // Predicated region
    $region54: #{tpu_custom_call.1} parent=1 // pred_check
      _
    $region55: #{tpu_custom_call.1} parent=1 // pred_check_branch
      %1526 = sbr.rel (0) target = $region57
    $region56: #{tpu_custom_call.1} parent=1 // pred_region
      %1527 = dma.done [#allocation4], 128
    $region57: #{tpu_custom_call.1} parent=1 // pred_fallthru
      _
    %1528 = vsyncpa [#allocation3], 1
    %1529 = vsyncpa [#allocation6], 1
    %1530 = vsyncpa [#allocation4], 1

</llo_original>
